<compile_context>
chip_gen: v5e
topology: v5e:2x2
jax: 0.10.0
libtpu: 0.0.40
codegen_flags: <defaults>
</compile_context>

<pallas_src>
import jax
import jax.numpy as jnp
from jax import lax
from jax.experimental import pallas as pl
from jax.experimental.pallas import tpu as pltpu


def _round_up(x, m):
    return ((x + m - 1) // m) * m


def lstm_chunk_kernel(x_ref, wih_ref, whh_ref, b_ref, len_ref, out_ref,
                      c_sc, gx_sc):
    """One grid step == Tc LSTM timesteps for one batch tile.

    x_ref   : (Tc, Bt, Dp)    matmul dtype (bf16 or f32)
    wih_ref : (Dp, 4*Hp)      matmul dtype  (resident)
    whh_ref : (Hp, 4*Hp)      matmul dtype  (resident)
    b_ref   : (1, 4*Hp)       f32  (b_ih + b_hh, gate-blocked)
    len_ref : (Bt, 1)         int32
    out_ref : (Bt, Hp)        f32  -- doubles as the resident h carry
    c_sc    : (Bt, Hp)        f32  cell carry
    gx_sc   : (Tc, Bt, 4*Hp)  f32  hoisted input projection for this chunk
    """
    Tc, Bt, Dp = x_ref.shape
    Hp = out_ref.shape[1]
    t_chunk = pl.program_id(1)

    @pl.when(t_chunk == 0)
    def _():
        out_ref[...] = jnp.zeros_like(out_ref)
        c_sc[...] = jnp.zeros_like(c_sc)

    # Hoisted input projection: one MXU-filling matmul for the whole time chunk.
    x2d = x_ref[...].reshape(Tc * Bt, Dp)
    gx = jnp.dot(x2d, wih_ref[...], preferred_element_type=jnp.float32)
    gx = gx + b_ref[...]
    gx_sc[...] = gx.reshape(Tc, Bt, 4 * Hp)

    lens = len_ref[...]            # (Bt, 1) int32
    t0 = t_chunk * Tc

    def step(s, carry):
        h, c = carry
        # Recurrent part only: small h @ W_hh^T on the MXU, f32 accumulation.
        gates = gx_sc[s] + jnp.dot(h.astype(whh_ref.dtype), whh_ref[...],
                                   preferred_element_type=jnp.float32)
        i_g = jax.nn.sigmoid(gates[:, 0 * Hp:1 * Hp])
        f_g = jax.nn.sigmoid(gates[:, 1 * Hp:2 * Hp])
        g_g = jnp.tanh(gates[:, 2 * Hp:3 * Hp])
        o_g = jax.nn.sigmoid(gates[:, 3 * Hp:4 * Hp])
        c_new = f_g * c + i_g * g_g
        h_new = o_g * jnp.tanh(c_new)
        # Variable-length masking: freeze h/c once t >= x_len[b]  (== pack_padded final h).
        keep = lens > (t0 + s)
        return jnp.where(keep, h_new, h), jnp.where(keep, c_new, c)

    h, c = lax.fori_loop(0, Tc, step, (out_ref[...], c_sc[...]), unroll=True)
    out_ref[...] = h
    c_sc[...] = c


def uni_lstm_forward(x, x_len, w_ih, w_hh, b_ih, b_hh, *,
                     time_chunk=8, batch_tile=256,
                     matmul_dtype=jnp.bfloat16):
    """x: (B, T, D) f32, x_len: (B,) int -> final hidden state (B, H) f32."""
    B, T, D = x.shape
    H = w_hh.shape[1]

    Hp = _round_up(H, 128)                       # lane-align gate blocks
    Dp = _round_up(D, 128)
    Bt = min(_round_up(B, 8), _round_up(batch_tile, 8))
    Bp = _round_up(B, Bt)
    Tc = min(time_chunk, T)
    Tp = _round_up(T, Tc)
    G4 = 4 * Hp

    # x -> padded, time-major (Tp, Bp, Dp) in matmul dtype.
    xp = jnp.zeros((Bp, Tp, Dp), matmul_dtype).at[:B, :T, :D].set(
        x.astype(matmul_dtype))
    x_tm = jnp.transpose(xp, (1, 0, 2))

    def pack_w(w, in_dim, in_dim_p):
        # PyTorch (4H, in) [i;f;g;o] -> transposed, gate-blocked, padded (in_p, 4*Hp).
        w4 = w.reshape(4, H, in_dim)
        w4p = jnp.zeros((4, Hp, in_dim_p), jnp.float32).at[:, :H, :in_dim].set(w4)
        return jnp.transpose(w4p, (2, 0, 1)).reshape(in_dim_p, G4).astype(matmul_dtype)

    wih_p = pack_w(w_ih, D, Dp)
    whh_p = pack_w(w_hh, H, Hp)

    b4 = (b_ih + b_hh).reshape(4, H)
    bias_p = jnp.zeros((4, Hp), jnp.float32).at[:, :H].set(b4).reshape(1, G4)

    lens_p = jnp.zeros((Bp, 1), jnp.int32).at[:B, 0].set(x_len.astype(jnp.int32))

    itemsize = jnp.dtype(matmul_dtype).itemsize
    cost = pl.CostEstimate(
        flops=2 * Tp * Bp * (Dp + Hp) * G4,
        transcendentals=5 * Tp * Bp * Hp,
        bytes_accessed=(x_tm.size * itemsize + wih_p.size * itemsize
                        + whh_p.size * itemsize + bias_p.size * 4
                        + lens_p.size * 4 + Bp * Hp * 4),
    )

    out = pl.pallas_call(
        lstm_chunk_kernel,
        out_shape=jax.ShapeDtypeStruct((Bp, Hp), jnp.float32),
        grid_spec=pltpu.PrefetchScalarGridSpec(
            num_scalar_prefetch=0,
            grid=(Bp // Bt, Tp // Tc),
            in_specs=[
                pl.BlockSpec((Tc, Bt, Dp), lambda b, t: (t, b, 0)),   # x time-chunk
                pl.BlockSpec((Dp, G4), lambda b, t: (0, 0)),          # W_ih^T (resident)
                pl.BlockSpec((Hp, G4), lambda b, t: (0, 0)),          # W_hh^T (resident)
                pl.BlockSpec((1, G4), lambda b, t: (0, 0)),           # bias
                pl.BlockSpec((Bt, 1), lambda b, t: (b, 0)),           # lengths
            ],
            out_specs=pl.BlockSpec((Bt, Hp), lambda b, t: (b, 0)),    # h carry / output
            scratch_shapes=[
                pltpu.VMEM((Bt, Hp), jnp.float32),       # c carry
                pltpu.VMEM((Tc, Bt, G4), jnp.float32),   # hoisted input projection
            ],
        ),
        compiler_params=pltpu.CompilerParams(
            dimension_semantics=("parallel", "arbitrary")),
        cost_estimate=cost,
    )(x_tm, wih_p, whh_p, bias_p, lens_p)

    return out[:B, :H]


def uni_lstm_ref(x, x_len, w_ih, w_hh, b_ih, b_hh):
    """Pure-JAX f32 reference (masked LSTM recurrence, PyTorch gate order)."""
    B, T, D = x.shape
    H = w_hh.shape[1]

    def step(carry, inp):
        h, c = carry
        xt, t = inp
        gates = xt @ w_ih.T + h @ w_hh.T + b_ih + b_hh
        i, f, g, o = jnp.split(gates, 4, axis=-1)
        i = jax.nn.sigmoid(i)
        f = jax.nn.sigmoid(f)
        g = jnp.tanh(g)
        o = jax.nn.sigmoid(o)
        c_new = f * c + i * g
        h_new = o * jnp.tanh(c_new)
        keep = (x_len > t)[:, None]
        return (jnp.where(keep, h_new, h), jnp.where(keep, c_new, c)), None

    h0 = jnp.zeros((B, H), jnp.float32)
    c0 = jnp.zeros((B, H), jnp.float32)
    (h, _), _ = lax.scan(step, (h0, c0),
                         (jnp.transpose(x, (1, 0, 2)), jnp.arange(T)))
    return h


if __name__ == "__main__":
    # Small shapes consistent with the module: vocab_size = (T, D) -> input_size = D.
    B, T, D, H = 2, 8, 16, 32

    key = jax.random.PRNGKey(0)
    k_x, k_len, k_wih, k_whh, k_bih, k_bhh = jax.random.split(key, 6)

    x = jax.random.normal(k_x, (B, T, D), dtype=jnp.float32)
    x_len = jax.random.randint(k_len, (B,), 1, T + 1).astype(jnp.int32)

    # Deterministic init mirroring nn.LSTM's uniform(-1/sqrt(H), 1/sqrt(H)).
    scale = 1.0 / jnp.sqrt(jnp.float32(H))
    w_ih = jax.random.uniform(k_wih, (4 * H, D), jnp.float32, -scale, scale)
    w_hh = jax.random.uniform(k_whh, (4 * H, H), jnp.float32, -scale, scale)
    b_ih = jax.random.uniform(k_bih, (4 * H,), jnp.float32, -scale, scale)
    b_hh = jax.random.uniform(k_bhh, (4 * H,), jnp.float32, -scale, scale)

    ref = uni_lstm_ref(x, x_len, w_ih, w_hh, b_ih, b_hh)

    # f32 matmuls, whole sequence in one time chunk.
    out_f32 = jax.block_until_ready(
        uni_lstm_forward(x, x_len, w_ih, w_hh, b_ih, b_hh,
                         matmul_dtype=jnp.float32))
    assert out_f32.shape == (B, H)
    assert jnp.allclose(out_f32, ref, atol=1e-5, rtol=1e-5), "f32 mismatch"

    # f32, multiple time chunks (exercises the h/c carry across grid steps).
    out_chunked = jax.block_until_ready(
        uni_lstm_forward(x, x_len, w_ih, w_hh, b_ih, b_hh,
                         time_chunk=4, matmul_dtype=jnp.float32))
    assert jnp.allclose(out_chunked, ref, atol=1e-5, rtol=1e-5), "chunked mismatch"

    # bf16 matmul operands (f32 accumulation, gate math and carries stay f32).
    out_bf16 = jax.block_until_ready(
        uni_lstm_forward(x, x_len, w_ih, w_hh, b_ih, b_hh,
                         matmul_dtype=jnp.bfloat16))
    assert jnp.allclose(out_bf16, ref, atol=5e-2, rtol=0), "bf16 mismatch"

    print("KERNEL_OK")
</pallas_src>

<mosaic_0001>
module attributes {stable_mosaic.version = 11 : i64} {
  func.func @lstm_chunk_kernel(%arg0: i32, %arg1: i32, %arg2: memref<8x8x128xf32, #tpu.memory_space<vmem>>, %arg3: memref<128x512xf32, #tpu.memory_space<vmem>>, %arg4: memref<128x512xf32, #tpu.memory_space<vmem>>, %arg5: memref<1x512xf32, #tpu.memory_space<vmem>>, %arg6: memref<8x1xi32, #tpu.memory_space<vmem>>, %arg7: memref<8x128xf32, #tpu.memory_space<vmem>>, %arg8: memref<8x128xf32, #tpu.memory_space<vmem>>, %arg9: memref<8x8x512xf32, #tpu.memory_space<vmem>>) attributes {dimension_semantics = [#tpu.dimension_semantics<parallel>, #tpu.dimension_semantics<arbitrary>], iteration_bounds = array<i64: 1, 1>, scalar_prefetch = 0 : i64, scratch_operands = 2 : i64, tpu.core_type = #tpu.core_type<tc>, window_params = [{transform_indices = @transform_0, window_bounds = array<i64: 8, 8, 128>}, {pipeline_mode = #tpu.pipeline_mode<synchronous>, transform_indices = @transform_1, window_bounds = array<i64: 128, 512>}, {pipeline_mode = #tpu.pipeline_mode<synchronous>, transform_indices = @transform_2, window_bounds = array<i64: 128, 512>}, {pipeline_mode = #tpu.pipeline_mode<synchronous>, transform_indices = @transform_3, window_bounds = array<i64: 1, 512>}, {transform_indices = @transform_4, window_bounds = array<i64: 8, 1>}, {transform_indices = @transform_5, window_bounds = array<i64: 8, 128>}]} {
    %c0_i32 = arith.constant 0 : i32
    %0 = arith.cmpi eq, %arg1, %c0_i32 : i32
    %1 = arith.extui %0 : i1 to i32
    %c0_i32_0 = arith.constant 0 : i32
    %2 = arith.cmpi ne, %1, %c0_i32_0 : i32
    scf.if %2 {
      %cst_86 = arith.constant 0.000000e+00 : f32
      %338 = vector.broadcast %cst_86 : f32 to vector<8x128xf32>
      %c0_87 = arith.constant 0 : index
      %c0_88 = arith.constant 0 : index
      %339 = vector.load %arg7[%c0_87, %c0_88] : memref<8x128xf32, #tpu.memory_space<vmem>>, vector<8x128xf32>
      tpu.vector_store %arg7[%c0_87, %c0_88], %338 {strides = array<i32>} : memref<8x128xf32, #tpu.memory_space<vmem>>, vector<8x128xf32>,
      %cst_89 = arith.constant 0.000000e+00 : f32
      %340 = vector.broadcast %cst_89 : f32 to vector<8x128xf32>
      %c0_90 = arith.constant 0 : index
      %c0_91 = arith.constant 0 : index
      %341 = vector.load %arg8[%c0_90, %c0_91] : memref<8x128xf32, #tpu.memory_space<vmem>>, vector<8x128xf32>
      tpu.vector_store %arg8[%c0_90, %c0_91], %340 {strides = array<i32>} : memref<8x128xf32, #tpu.memory_space<vmem>>, vector<8x128xf32>,
    } else {
    }
    %c0 = arith.constant 0 : index
    %c0_1 = arith.constant 0 : index
    %c0_2 = arith.constant 0 : index
    %3 = vector.load %arg2[%c0, %c0_1, %c0_2] : memref<8x8x128xf32, #tpu.memory_space<vmem>>, vector<8x8x128xf32>
    %4 = vector.shape_cast %3 : vector<8x8x128xf32> to vector<64x128xf32>
    %c0_3 = arith.constant 0 : index
    %c0_4 = arith.constant 0 : index
    %5 = vector.load %arg3[%c0_3, %c0_4] : memref<128x512xf32, #tpu.memory_space<vmem>>, vector<128x512xf32>
    %cst = arith.constant dense<0.000000e+00> : vector<64x512xf32>
    %6 = tpu.matmul %4, %5, %cst {dimension_numbers = #tpu.dot_dimension_numbers<[1], [0], [0], [1], [0, 0, 1, 1], [], []>} : vector<64x128xf32>, vector<128x512xf32>, vector<64x512xf32> -> vector<64x512xf32>
    %c0_5 = arith.constant 0 : index
    %c0_6 = arith.constant 0 : index
    %7 = vector.load %arg5[%c0_5, %c0_6] : memref<1x512xf32, #tpu.memory_space<vmem>>, vector<1x512xf32>
    %8 = vector.broadcast %7 : vector<1x512xf32> to vector<64x512xf32>
    %9 = arith.addf %6, %8 : vector<64x512xf32>
    %10 = vector.shape_cast %9 : vector<64x512xf32> to vector<8x8x512xf32>
    %c0_7 = arith.constant 0 : index
    %c0_8 = arith.constant 0 : index
    %c0_9 = arith.constant 0 : index
    %11 = vector.load %arg9[%c0_7, %c0_8, %c0_9] : memref<8x8x512xf32, #tpu.memory_space<vmem>>, vector<8x8x512xf32>
    tpu.vector_store %arg9[%c0_7, %c0_8, %c0_9], %10 {strides = array<i32>} : memref<8x8x512xf32, #tpu.memory_space<vmem>>, vector<8x8x512xf32>,
    %c0_10 = arith.constant 0 : index
    %c0_11 = arith.constant 0 : index
    %12 = vector.load %arg6[%c0_10, %c0_11] : memref<8x1xi32, #tpu.memory_space<vmem>>, vector<8x1xi32>
    %c8_i32 = arith.constant 8 : i32
    %13 = arith.muli %arg1, %c8_i32 : i32
    %c0_12 = arith.constant 0 : index
    %c0_13 = arith.constant 0 : index
    %14 = vector.load %arg7[%c0_12, %c0_13] : memref<8x128xf32, #tpu.memory_space<vmem>>, vector<8x128xf32>
    %c0_14 = arith.constant 0 : index
    %c0_15 = arith.constant 0 : index
    %15 = vector.load %arg8[%c0_14, %c0_15] : memref<8x128xf32, #tpu.memory_space<vmem>>, vector<8x128xf32>
    %c0_i32_16 = arith.constant 0 : i32
    %16 = arith.index_cast %c0_i32_16 : i32 to index
    %c0_17 = arith.constant 0 : index
    %c0_18 = arith.constant 0 : index
    %17 = vector.load %arg9[%16, %c0_17, %c0_18] : memref<8x8x512xf32, #tpu.memory_space<vmem>>, vector<1x8x512xf32>
    %18 = vector.shape_cast %17 : vector<1x8x512xf32> to vector<8x512xf32>
    %c0_19 = arith.constant 0 : index
    %c0_20 = arith.constant 0 : index
    %19 = vector.load %arg4[%c0_19, %c0_20] : memref<128x512xf32, #tpu.memory_space<vmem>>, vector<128x512xf32>
    %cst_21 = arith.constant dense<0.000000e+00> : vector<8x512xf32>
    %20 = tpu.matmul %14, %19, %cst_21 {dimension_numbers = #tpu.dot_dimension_numbers<[1], [0], [0], [1], [0, 0, 1, 1], [], []>} : vector<8x128xf32>, vector<128x512xf32>, vector<8x512xf32> -> vector<8x512xf32>
    %21 = arith.addf %18, %20 : vector<8x512xf32>
    %22 = vector.extract_strided_slice %21 {offsets = [0, 0], sizes = [8, 128], strides = [1, 1]} : vector<8x512xf32> to vector<8x128xf32>
    %23 = arith.negf %22 : vector<8x128xf32>
    %24 = math.exp %23 : vector<8x128xf32>
    %cst_22 = arith.constant 1.000000e+00 : f32
    %25 = vector.broadcast %cst_22 : f32 to vector<8x128xf32>
    %26 = arith.addf %25, %24 : vector<8x128xf32>
    %27 = arith.divf %25, %26 : vector<8x128xf32>
    %28 = vector.extract_strided_slice %21 {offsets = [0, 128], sizes = [8, 128], strides = [1, 1]} : vector<8x512xf32> to vector<8x128xf32>
    %29 = arith.negf %28 : vector<8x128xf32>
    %30 = math.exp %29 : vector<8x128xf32>
    %cst_23 = arith.constant 1.000000e+00 : f32
    %31 = vector.broadcast %cst_23 : f32 to vector<8x128xf32>
    %32 = arith.addf %31, %30 : vector<8x128xf32>
    %33 = arith.divf %31, %32 : vector<8x128xf32>
    %34 = vector.extract_strided_slice %21 {offsets = [0, 256], sizes = [8, 128], strides = [1, 1]} : vector<8x512xf32> to vector<8x128xf32>
    %35 = math.tanh %34 : vector<8x128xf32>
    %36 = vector.extract_strided_slice %21 {offsets = [0, 384], sizes = [8, 128], strides = [1, 1]} : vector<8x512xf32> to vector<8x128xf32>
    %37 = arith.negf %36 : vector<8x128xf32>
    %38 = math.exp %37 : vector<8x128xf32>
    %cst_24 = arith.constant 1.000000e+00 : f32
    %39 = vector.broadcast %cst_24 : f32 to vector<8x128xf32>
    %40 = arith.addf %39, %38 : vector<8x128xf32>
    %41 = arith.divf %39, %40 : vector<8x128xf32>
    %42 = arith.mulf %33, %15 : vector<8x128xf32>
    %43 = arith.mulf %27, %35 : vector<8x128xf32>
    %44 = arith.addf %42, %43 : vector<8x128xf32>
    %45 = math.tanh %44 : vector<8x128xf32>
    %46 = arith.mulf %41, %45 : vector<8x128xf32>
    %47 = arith.addi %13, %c0_i32_16 : i32
    %48 = vector.broadcast %47 : i32 to vector<8x1xi32>
    %49 = arith.cmpi sgt, %12, %48 : vector<8x1xi32>
    %50 = vector.shape_cast %49 : vector<8x1xi1> to vector<8x1xi1>
    %51 = vector.broadcast %50 : vector<8x1xi1> to vector<8x128xi1>
    %52 = arith.select %51, %46, %14 : vector<8x128xi1>, vector<8x128xf32>
    %53 = vector.shape_cast %49 : vector<8x1xi1> to vector<8x1xi1>
    %54 = vector.broadcast %53 : vector<8x1xi1> to vector<8x128xi1>
    %55 = arith.select %54, %44, %15 : vector<8x128xi1>, vector<8x128xf32>
    %c1_i32 = arith.constant 1 : i32
    %56 = arith.index_cast %c1_i32 : i32 to index
    %c0_25 = arith.constant 0 : index
    %c0_26 = arith.constant 0 : index
    %57 = vector.load %arg9[%56, %c0_25, %c0_26] : memref<8x8x512xf32, #tpu.memory_space<vmem>>, vector<1x8x512xf32>
    %58 = vector.shape_cast %57 : vector<1x8x512xf32> to vector<8x512xf32>
    %c0_27 = arith.constant 0 : index
    %c0_28 = arith.constant 0 : index
    %59 = vector.load %arg4[%c0_27, %c0_28] : memref<128x512xf32, #tpu.memory_space<vmem>>, vector<128x512xf32>
    %cst_29 = arith.constant dense<0.000000e+00> : vector<8x512xf32>
    %60 = tpu.matmul %52, %59, %cst_29 {dimension_numbers = #tpu.dot_dimension_numbers<[1], [0], [0], [1], [0, 0, 1, 1], [], []>} : vector<8x128xf32>, vector<128x512xf32>, vector<8x512xf32> -> vector<8x512xf32>
    %61 = arith.addf %58, %60 : vector<8x512xf32>
    %62 = vector.extract_strided_slice %61 {offsets = [0, 0], sizes = [8, 128], strides = [1, 1]} : vector<8x512xf32> to vector<8x128xf32>
    %63 = arith.negf %62 : vector<8x128xf32>
    %64 = math.exp %63 : vector<8x128xf32>
    %cst_30 = arith.constant 1.000000e+00 : f32
    %65 = vector.broadcast %cst_30 : f32 to vector<8x128xf32>
    %66 = arith.addf %65, %64 : vector<8x128xf32>
    %67 = arith.divf %65, %66 : vector<8x128xf32>
    %68 = vector.extract_strided_slice %61 {offsets = [0, 128], sizes = [8, 128], strides = [1, 1]} : vector<8x512xf32> to vector<8x128xf32>
    %69 = arith.negf %68 : vector<8x128xf32>
    %70 = math.exp %69 : vector<8x128xf32>
    %cst_31 = arith.constant 1.000000e+00 : f32
    %71 = vector.broadcast %cst_31 : f32 to vector<8x128xf32>
    %72 = arith.addf %71, %70 : vector<8x128xf32>
    %73 = arith.divf %71, %72 : vector<8x128xf32>
    %74 = vector.extract_strided_slice %61 {offsets = [0, 256], sizes = [8, 128], strides = [1, 1]} : vector<8x512xf32> to vector<8x128xf32>
    %75 = math.tanh %74 : vector<8x128xf32>
    %76 = vector.extract_strided_slice %61 {offsets = [0, 384], sizes = [8, 128], strides = [1, 1]} : vector<8x512xf32> to vector<8x128xf32>
    %77 = arith.negf %76 : vector<8x128xf32>
    %78 = math.exp %77 : vector<8x128xf32>
    %cst_32 = arith.constant 1.000000e+00 : f32
    %79 = vector.broadcast %cst_32 : f32 to vector<8x128xf32>
    %80 = arith.addf %79, %78 : vector<8x128xf32>
    %81 = arith.divf %79, %80 : vector<8x128xf32>
    %82 = arith.mulf %73, %55 : vector<8x128xf32>
    %83 = arith.mulf %67, %75 : vector<8x128xf32>
    %84 = arith.addf %82, %83 : vector<8x128xf32>
    %85 = math.tanh %84 : vector<8x128xf32>
    %86 = arith.mulf %81, %85 : vector<8x128xf32>
    %87 = arith.addi %13, %c1_i32 : i32
    %88 = vector.broadcast %87 : i32 to vector<8x1xi32>
    %89 = arith.cmpi sgt, %12, %88 : vector<8x1xi32>
    %90 = vector.shape_cast %89 : vector<8x1xi1> to vector<8x1xi1>
    %91 = vector.broadcast %90 : vector<8x1xi1> to vector<8x128xi1>
    %92 = arith.select %91, %86, %52 : vector<8x128xi1>, vector<8x128xf32>
    %93 = vector.shape_cast %89 : vector<8x1xi1> to vector<8x1xi1>
    %94 = vector.broadcast %93 : vector<8x1xi1> to vector<8x128xi1>
    %95 = arith.select %94, %84, %55 : vector<8x128xi1>, vector<8x128xf32>
    %c2_i32 = arith.constant 2 : i32
    %96 = arith.index_cast %c2_i32 : i32 to index
    %c0_33 = arith.constant 0 : index
    %c0_34 = arith.constant 0 : index
    %97 = vector.load %arg9[%96, %c0_33, %c0_34] : memref<8x8x512xf32, #tpu.memory_space<vmem>>, vector<1x8x512xf32>
    %98 = vector.shape_cast %97 : vector<1x8x512xf32> to vector<8x512xf32>
    %c0_35 = arith.constant 0 : index
    %c0_36 = arith.constant 0 : index
    %99 = vector.load %arg4[%c0_35, %c0_36] : memref<128x512xf32, #tpu.memory_space<vmem>>, vector<128x512xf32>
    %cst_37 = arith.constant dense<0.000000e+00> : vector<8x512xf32>
    %100 = tpu.matmul %92, %99, %cst_37 {dimension_numbers = #tpu.dot_dimension_numbers<[1], [0], [0], [1], [0, 0, 1, 1], [], []>} : vector<8x128xf32>, vector<128x512xf32>, vector<8x512xf32> -> vector<8x512xf32>
    %101 = arith.addf %98, %100 : vector<8x512xf32>
    %102 = vector.extract_strided_slice %101 {offsets = [0, 0], sizes = [8, 128], strides = [1, 1]} : vector<8x512xf32> to vector<8x128xf32>
    %103 = arith.negf %102 : vector<8x128xf32>
    %104 = math.exp %103 : vector<8x128xf32>
    %cst_38 = arith.constant 1.000000e+00 : f32
    %105 = vector.broadcast %cst_38 : f32 to vector<8x128xf32>
    %106 = arith.addf %105, %104 : vector<8x128xf32>
    %107 = arith.divf %105, %106 : vector<8x128xf32>
    %108 = vector.extract_strided_slice %101 {offsets = [0, 128], sizes = [8, 128], strides = [1, 1]} : vector<8x512xf32> to vector<8x128xf32>
    %109 = arith.negf %108 : vector<8x128xf32>
    %110 = math.exp %109 : vector<8x128xf32>
    %cst_39 = arith.constant 1.000000e+00 : f32
    %111 = vector.broadcast %cst_39 : f32 to vector<8x128xf32>
    %112 = arith.addf %111, %110 : vector<8x128xf32>
    %113 = arith.divf %111, %112 : vector<8x128xf32>
    %114 = vector.extract_strided_slice %101 {offsets = [0, 256], sizes = [8, 128], strides = [1, 1]} : vector<8x512xf32> to vector<8x128xf32>
    %115 = math.tanh %114 : vector<8x128xf32>
    %116 = vector.extract_strided_slice %101 {offsets = [0, 384], sizes = [8, 128], strides = [1, 1]} : vector<8x512xf32> to vector<8x128xf32>
    %117 = arith.negf %116 : vector<8x128xf32>
    %118 = math.exp %117 : vector<8x128xf32>
    %cst_40 = arith.constant 1.000000e+00 : f32
    %119 = vector.broadcast %cst_40 : f32 to vector<8x128xf32>
    %120 = arith.addf %119, %118 : vector<8x128xf32>
    %121 = arith.divf %119, %120 : vector<8x128xf32>
    %122 = arith.mulf %113, %95 : vector<8x128xf32>
    %123 = arith.mulf %107, %115 : vector<8x128xf32>
    %124 = arith.addf %122, %123 : vector<8x128xf32>
    %125 = math.tanh %124 : vector<8x128xf32>
    %126 = arith.mulf %121, %125 : vector<8x128xf32>
    %127 = arith.addi %13, %c2_i32 : i32
    %128 = vector.broadcast %127 : i32 to vector<8x1xi32>
    %129 = arith.cmpi sgt, %12, %128 : vector<8x1xi32>
    %130 = vector.shape_cast %129 : vector<8x1xi1> to vector<8x1xi1>
    %131 = vector.broadcast %130 : vector<8x1xi1> to vector<8x128xi1>
    %132 = arith.select %131, %126, %92 : vector<8x128xi1>, vector<8x128xf32>
    %133 = vector.shape_cast %129 : vector<8x1xi1> to vector<8x1xi1>
    %134 = vector.broadcast %133 : vector<8x1xi1> to vector<8x128xi1>
    %135 = arith.select %134, %124, %95 : vector<8x128xi1>, vector<8x128xf32>
    %c3_i32 = arith.constant 3 : i32
    %136 = arith.index_cast %c3_i32 : i32 to index
    %c0_41 = arith.constant 0 : index
    %c0_42 = arith.constant 0 : index
    %137 = vector.load %arg9[%136, %c0_41, %c0_42] : memref<8x8x512xf32, #tpu.memory_space<vmem>>, vector<1x8x512xf32>
    %138 = vector.shape_cast %137 : vector<1x8x512xf32> to vector<8x512xf32>
    %c0_43 = arith.constant 0 : index
    %c0_44 = arith.constant 0 : index
    %139 = vector.load %arg4[%c0_43, %c0_44] : memref<128x512xf32, #tpu.memory_space<vmem>>, vector<128x512xf32>
    %cst_45 = arith.constant dense<0.000000e+00> : vector<8x512xf32>
    %140 = tpu.matmul %132, %139, %cst_45 {dimension_numbers = #tpu.dot_dimension_numbers<[1], [0], [0], [1], [0, 0, 1, 1], [], []>} : vector<8x128xf32>, vector<128x512xf32>, vector<8x512xf32> -> vector<8x512xf32>
    %141 = arith.addf %138, %140 : vector<8x512xf32>
    %142 = vector.extract_strided_slice %141 {offsets = [0, 0], sizes = [8, 128], strides = [1, 1]} : vector<8x512xf32> to vector<8x128xf32>
    %143 = arith.negf %142 : vector<8x128xf32>
    %144 = math.exp %143 : vector<8x128xf32>
    %cst_46 = arith.constant 1.000000e+00 : f32
    %145 = vector.broadcast %cst_46 : f32 to vector<8x128xf32>
    %146 = arith.addf %145, %144 : vector<8x128xf32>
    %147 = arith.divf %145, %146 : vector<8x128xf32>
    %148 = vector.extract_strided_slice %141 {offsets = [0, 128], sizes = [8, 128], strides = [1, 1]} : vector<8x512xf32> to vector<8x128xf32>
    %149 = arith.negf %148 : vector<8x128xf32>
    %150 = math.exp %149 : vector<8x128xf32>
    %cst_47 = arith.constant 1.000000e+00 : f32
    %151 = vector.broadcast %cst_47 : f32 to vector<8x128xf32>
    %152 = arith.addf %151, %150 : vector<8x128xf32>
    %153 = arith.divf %151, %152 : vector<8x128xf32>
    %154 = vector.extract_strided_slice %141 {offsets = [0, 256], sizes = [8, 128], strides = [1, 1]} : vector<8x512xf32> to vector<8x128xf32>
    %155 = math.tanh %154 : vector<8x128xf32>
    %156 = vector.extract_strided_slice %141 {offsets = [0, 384], sizes = [8, 128], strides = [1, 1]} : vector<8x512xf32> to vector<8x128xf32>
    %157 = arith.negf %156 : vector<8x128xf32>
    %158 = math.exp %157 : vector<8x128xf32>
    %cst_48 = arith.constant 1.000000e+00 : f32
    %159 = vector.broadcast %cst_48 : f32 to vector<8x128xf32>
    %160 = arith.addf %159, %158 : vector<8x128xf32>
    %161 = arith.divf %159, %160 : vector<8x128xf32>
    %162 = arith.mulf %153, %135 : vector<8x128xf32>
    %163 = arith.mulf %147, %155 : vector<8x128xf32>
    %164 = arith.addf %162, %163 : vector<8x128xf32>
    %165 = math.tanh %164 : vector<8x128xf32>
    %166 = arith.mulf %161, %165 : vector<8x128xf32>
    %167 = arith.addi %13, %c3_i32 : i32
    %168 = vector.broadcast %167 : i32 to vector<8x1xi32>
    %169 = arith.cmpi sgt, %12, %168 : vector<8x1xi32>
    %170 = vector.shape_cast %169 : vector<8x1xi1> to vector<8x1xi1>
    %171 = vector.broadcast %170 : vector<8x1xi1> to vector<8x128xi1>
    %172 = arith.select %171, %166, %132 : vector<8x128xi1>, vector<8x128xf32>
    %173 = vector.shape_cast %169 : vector<8x1xi1> to vector<8x1xi1>
    %174 = vector.broadcast %173 : vector<8x1xi1> to vector<8x128xi1>
    %175 = arith.select %174, %164, %135 : vector<8x128xi1>, vector<8x128xf32>
    %c4_i32 = arith.constant 4 : i32
    %176 = arith.index_cast %c4_i32 : i32 to index
    %c0_49 = arith.constant 0 : index
    %c0_50 = arith.constant 0 : index
    %177 = vector.load %arg9[%176, %c0_49, %c0_50] : memref<8x8x512xf32, #tpu.memory_space<vmem>>, vector<1x8x512xf32>
    %178 = vector.shape_cast %177 : vector<1x8x512xf32> to vector<8x512xf32>
    %c0_51 = arith.constant 0 : index
    %c0_52 = arith.constant 0 : index
    %179 = vector.load %arg4[%c0_51, %c0_52] : memref<128x512xf32, #tpu.memory_space<vmem>>, vector<128x512xf32>
    %cst_53 = arith.constant dense<0.000000e+00> : vector<8x512xf32>
    %180 = tpu.matmul %172, %179, %cst_53 {dimension_numbers = #tpu.dot_dimension_numbers<[1], [0], [0], [1], [0, 0, 1, 1], [], []>} : vector<8x128xf32>, vector<128x512xf32>, vector<8x512xf32> -> vector<8x512xf32>
    %181 = arith.addf %178, %180 : vector<8x512xf32>
    %182 = vector.extract_strided_slice %181 {offsets = [0, 0], sizes = [8, 128], strides = [1, 1]} : vector<8x512xf32> to vector<8x128xf32>
    %183 = arith.negf %182 : vector<8x128xf32>
    %184 = math.exp %183 : vector<8x128xf32>
    %cst_54 = arith.constant 1.000000e+00 : f32
    %185 = vector.broadcast %cst_54 : f32 to vector<8x128xf32>
    %186 = arith.addf %185, %184 : vector<8x128xf32>
    %187 = arith.divf %185, %186 : vector<8x128xf32>
    %188 = vector.extract_strided_slice %181 {offsets = [0, 128], sizes = [8, 128], strides = [1, 1]} : vector<8x512xf32> to vector<8x128xf32>
    %189 = arith.negf %188 : vector<8x128xf32>
    %190 = math.exp %189 : vector<8x128xf32>
    %cst_55 = arith.constant 1.000000e+00 : f32
    %191 = vector.broadcast %cst_55 : f32 to vector<8x128xf32>
    %192 = arith.addf %191, %190 : vector<8x128xf32>
    %193 = arith.divf %191, %192 : vector<8x128xf32>
    %194 = vector.extract_strided_slice %181 {offsets = [0, 256], sizes = [8, 128], strides = [1, 1]} : vector<8x512xf32> to vector<8x128xf32>
    %195 = math.tanh %194 : vector<8x128xf32>
    %196 = vector.extract_strided_slice %181 {offsets = [0, 384], sizes = [8, 128], strides = [1, 1]} : vector<8x512xf32> to vector<8x128xf32>
    %197 = arith.negf %196 : vector<8x128xf32>
    %198 = math.exp %197 : vector<8x128xf32>
    %cst_56 = arith.constant 1.000000e+00 : f32
    %199 = vector.broadcast %cst_56 : f32 to vector<8x128xf32>
    %200 = arith.addf %199, %198 : vector<8x128xf32>
    %201 = arith.divf %199, %200 : vector<8x128xf32>
    %202 = arith.mulf %193, %175 : vector<8x128xf32>
    %203 = arith.mulf %187, %195 : vector<8x128xf32>
    %204 = arith.addf %202, %203 : vector<8x128xf32>
    %205 = math.tanh %204 : vector<8x128xf32>
    %206 = arith.mulf %201, %205 : vector<8x128xf32>
    %207 = arith.addi %13, %c4_i32 : i32
    %208 = vector.broadcast %207 : i32 to vector<8x1xi32>
    %209 = arith.cmpi sgt, %12, %208 : vector<8x1xi32>
    %210 = vector.shape_cast %209 : vector<8x1xi1> to vector<8x1xi1>
    %211 = vector.broadcast %210 : vector<8x1xi1> to vector<8x128xi1>
    %212 = arith.select %211, %206, %172 : vector<8x128xi1>, vector<8x128xf32>
    %213 = vector.shape_cast %209 : vector<8x1xi1> to vector<8x1xi1>
    %214 = vector.broadcast %213 : vector<8x1xi1> to vector<8x128xi1>
    %215 = arith.select %214, %204, %175 : vector<8x128xi1>, vector<8x128xf32>
    %c5_i32 = arith.constant 5 : i32
    %216 = arith.index_cast %c5_i32 : i32 to index
    %c0_57 = arith.constant 0 : index
    %c0_58 = arith.constant 0 : index
    %217 = vector.load %arg9[%216, %c0_57, %c0_58] : memref<8x8x512xf32, #tpu.memory_space<vmem>>, vector<1x8x512xf32>
    %218 = vector.shape_cast %217 : vector<1x8x512xf32> to vector<8x512xf32>
    %c0_59 = arith.constant 0 : index
    %c0_60 = arith.constant 0 : index
    %219 = vector.load %arg4[%c0_59, %c0_60] : memref<128x512xf32, #tpu.memory_space<vmem>>, vector<128x512xf32>
    %cst_61 = arith.constant dense<0.000000e+00> : vector<8x512xf32>
    %220 = tpu.matmul %212, %219, %cst_61 {dimension_numbers = #tpu.dot_dimension_numbers<[1], [0], [0], [1], [0, 0, 1, 1], [], []>} : vector<8x128xf32>, vector<128x512xf32>, vector<8x512xf32> -> vector<8x512xf32>
    %221 = arith.addf %218, %220 : vector<8x512xf32>
    %222 = vector.extract_strided_slice %221 {offsets = [0, 0], sizes = [8, 128], strides = [1, 1]} : vector<8x512xf32> to vector<8x128xf32>
    %223 = arith.negf %222 : vector<8x128xf32>
    %224 = math.exp %223 : vector<8x128xf32>
    %cst_62 = arith.constant 1.000000e+00 : f32
    %225 = vector.broadcast %cst_62 : f32 to vector<8x128xf32>
    %226 = arith.addf %225, %224 : vector<8x128xf32>
    %227 = arith.divf %225, %226 : vector<8x128xf32>
    %228 = vector.extract_strided_slice %221 {offsets = [0, 128], sizes = [8, 128], strides = [1, 1]} : vector<8x512xf32> to vector<8x128xf32>
    %229 = arith.negf %228 : vector<8x128xf32>
    %230 = math.exp %229 : vector<8x128xf32>
    %cst_63 = arith.constant 1.000000e+00 : f32
    %231 = vector.broadcast %cst_63 : f32 to vector<8x128xf32>
    %232 = arith.addf %231, %230 : vector<8x128xf32>
    %233 = arith.divf %231, %232 : vector<8x128xf32>
    %234 = vector.extract_strided_slice %221 {offsets = [0, 256], sizes = [8, 128], strides = [1, 1]} : vector<8x512xf32> to vector<8x128xf32>
    %235 = math.tanh %234 : vector<8x128xf32>
    %236 = vector.extract_strided_slice %221 {offsets = [0, 384], sizes = [8, 128], strides = [1, 1]} : vector<8x512xf32> to vector<8x128xf32>
    %237 = arith.negf %236 : vector<8x128xf32>
    %238 = math.exp %237 : vector<8x128xf32>
    %cst_64 = arith.constant 1.000000e+00 : f32
    %239 = vector.broadcast %cst_64 : f32 to vector<8x128xf32>
    %240 = arith.addf %239, %238 : vector<8x128xf32>
    %241 = arith.divf %239, %240 : vector<8x128xf32>
    %242 = arith.mulf %233, %215 : vector<8x128xf32>
    %243 = arith.mulf %227, %235 : vector<8x128xf32>
    %244 = arith.addf %242, %243 : vector<8x128xf32>
    %245 = math.tanh %244 : vector<8x128xf32>
    %246 = arith.mulf %241, %245 : vector<8x128xf32>
    %247 = arith.addi %13, %c5_i32 : i32
    %248 = vector.broadcast %247 : i32 to vector<8x1xi32>
    %249 = arith.cmpi sgt, %12, %248 : vector<8x1xi32>
    %250 = vector.shape_cast %249 : vector<8x1xi1> to vector<8x1xi1>
    %251 = vector.broadcast %250 : vector<8x1xi1> to vector<8x128xi1>
    %252 = arith.select %251, %246, %212 : vector<8x128xi1>, vector<8x128xf32>
    %253 = vector.shape_cast %249 : vector<8x1xi1> to vector<8x1xi1>
    %254 = vector.broadcast %253 : vector<8x1xi1> to vector<8x128xi1>
    %255 = arith.select %254, %244, %215 : vector<8x128xi1>, vector<8x128xf32>
    %c6_i32 = arith.constant 6 : i32
    %256 = arith.index_cast %c6_i32 : i32 to index
    %c0_65 = arith.constant 0 : index
    %c0_66 = arith.constant 0 : index
    %257 = vector.load %arg9[%256, %c0_65, %c0_66] : memref<8x8x512xf32, #tpu.memory_space<vmem>>, vector<1x8x512xf32>
    %258 = vector.shape_cast %257 : vector<1x8x512xf32> to vector<8x512xf32>
    %c0_67 = arith.constant 0 : index
    %c0_68 = arith.constant 0 : index
    %259 = vector.load %arg4[%c0_67, %c0_68] : memref<128x512xf32, #tpu.memory_space<vmem>>, vector<128x512xf32>
    %cst_69 = arith.constant dense<0.000000e+00> : vector<8x512xf32>
    %260 = tpu.matmul %252, %259, %cst_69 {dimension_numbers = #tpu.dot_dimension_numbers<[1], [0], [0], [1], [0, 0, 1, 1], [], []>} : vector<8x128xf32>, vector<128x512xf32>, vector<8x512xf32> -> vector<8x512xf32>
    %261 = arith.addf %258, %260 : vector<8x512xf32>
    %262 = vector.extract_strided_slice %261 {offsets = [0, 0], sizes = [8, 128], strides = [1, 1]} : vector<8x512xf32> to vector<8x128xf32>
    %263 = arith.negf %262 : vector<8x128xf32>
    %264 = math.exp %263 : vector<8x128xf32>
    %cst_70 = arith.constant 1.000000e+00 : f32
    %265 = vector.broadcast %cst_70 : f32 to vector<8x128xf32>
    %266 = arith.addf %265, %264 : vector<8x128xf32>
    %267 = arith.divf %265, %266 : vector<8x128xf32>
    %268 = vector.extract_strided_slice %261 {offsets = [0, 128], sizes = [8, 128], strides = [1, 1]} : vector<8x512xf32> to vector<8x128xf32>
    %269 = arith.negf %268 : vector<8x128xf32>
    %270 = math.exp %269 : vector<8x128xf32>
    %cst_71 = arith.constant 1.000000e+00 : f32
    %271 = vector.broadcast %cst_71 : f32 to vector<8x128xf32>
    %272 = arith.addf %271, %270 : vector<8x128xf32>
    %273 = arith.divf %271, %272 : vector<8x128xf32>
    %274 = vector.extract_strided_slice %261 {offsets = [0, 256], sizes = [8, 128], strides = [1, 1]} : vector<8x512xf32> to vector<8x128xf32>
    %275 = math.tanh %274 : vector<8x128xf32>
    %276 = vector.extract_strided_slice %261 {offsets = [0, 384], sizes = [8, 128], strides = [1, 1]} : vector<8x512xf32> to vector<8x128xf32>
    %277 = arith.negf %276 : vector<8x128xf32>
    %278 = math.exp %277 : vector<8x128xf32>
    %cst_72 = arith.constant 1.000000e+00 : f32
    %279 = vector.broadcast %cst_72 : f32 to vector<8x128xf32>
    %280 = arith.addf %279, %278 : vector<8x128xf32>
    %281 = arith.divf %279, %280 : vector<8x128xf32>
    %282 = arith.mulf %273, %255 : vector<8x128xf32>
    %283 = arith.mulf %267, %275 : vector<8x128xf32>
    %284 = arith.addf %282, %283 : vector<8x128xf32>
    %285 = math.tanh %284 : vector<8x128xf32>
    %286 = arith.mulf %281, %285 : vector<8x128xf32>
    %287 = arith.addi %13, %c6_i32 : i32
    %288 = vector.broadcast %287 : i32 to vector<8x1xi32>
    %289 = arith.cmpi sgt, %12, %288 : vector<8x1xi32>
    %290 = vector.shape_cast %289 : vector<8x1xi1> to vector<8x1xi1>
    %291 = vector.broadcast %290 : vector<8x1xi1> to vector<8x128xi1>
    %292 = arith.select %291, %286, %252 : vector<8x128xi1>, vector<8x128xf32>
    %293 = vector.shape_cast %289 : vector<8x1xi1> to vector<8x1xi1>
    %294 = vector.broadcast %293 : vector<8x1xi1> to vector<8x128xi1>
    %295 = arith.select %294, %284, %255 : vector<8x128xi1>, vector<8x128xf32>
    %c7_i32 = arith.constant 7 : i32
    %296 = arith.index_cast %c7_i32 : i32 to index
    %c0_73 = arith.constant 0 : index
    %c0_74 = arith.constant 0 : index
    %297 = vector.load %arg9[%296, %c0_73, %c0_74] : memref<8x8x512xf32, #tpu.memory_space<vmem>>, vector<1x8x512xf32>
    %298 = vector.shape_cast %297 : vector<1x8x512xf32> to vector<8x512xf32>
    %c0_75 = arith.constant 0 : index
    %c0_76 = arith.constant 0 : index
    %299 = vector.load %arg4[%c0_75, %c0_76] : memref<128x512xf32, #tpu.memory_space<vmem>>, vector<128x512xf32>
    %cst_77 = arith.constant dense<0.000000e+00> : vector<8x512xf32>
    %300 = tpu.matmul %292, %299, %cst_77 {dimension_numbers = #tpu.dot_dimension_numbers<[1], [0], [0], [1], [0, 0, 1, 1], [], []>} : vector<8x128xf32>, vector<128x512xf32>, vector<8x512xf32> -> vector<8x512xf32>
    %301 = arith.addf %298, %300 : vector<8x512xf32>
    %302 = vector.extract_strided_slice %301 {offsets = [0, 0], sizes = [8, 128], strides = [1, 1]} : vector<8x512xf32> to vector<8x128xf32>
    %303 = arith.negf %302 : vector<8x128xf32>
    %304 = math.exp %303 : vector<8x128xf32>
    %cst_78 = arith.constant 1.000000e+00 : f32
    %305 = vector.broadcast %cst_78 : f32 to vector<8x128xf32>
    %306 = arith.addf %305, %304 : vector<8x128xf32>
    %307 = arith.divf %305, %306 : vector<8x128xf32>
    %308 = vector.extract_strided_slice %301 {offsets = [0, 128], sizes = [8, 128], strides = [1, 1]} : vector<8x512xf32> to vector<8x128xf32>
    %309 = arith.negf %308 : vector<8x128xf32>
    %310 = math.exp %309 : vector<8x128xf32>
    %cst_79 = arith.constant 1.000000e+00 : f32
    %311 = vector.broadcast %cst_79 : f32 to vector<8x128xf32>
    %312 = arith.addf %311, %310 : vector<8x128xf32>
    %313 = arith.divf %311, %312 : vector<8x128xf32>
    %314 = vector.extract_strided_slice %301 {offsets = [0, 256], sizes = [8, 128], strides = [1, 1]} : vector<8x512xf32> to vector<8x128xf32>
    %315 = math.tanh %314 : vector<8x128xf32>
    %316 = vector.extract_strided_slice %301 {offsets = [0, 384], sizes = [8, 128], strides = [1, 1]} : vector<8x512xf32> to vector<8x128xf32>
    %317 = arith.negf %316 : vector<8x128xf32>
    %318 = math.exp %317 : vector<8x128xf32>
    %cst_80 = arith.constant 1.000000e+00 : f32
    %319 = vector.broadcast %cst_80 : f32 to vector<8x128xf32>
    %320 = arith.addf %319, %318 : vector<8x128xf32>
    %321 = arith.divf %319, %320 : vector<8x128xf32>
    %322 = arith.mulf %313, %295 : vector<8x128xf32>
    %323 = arith.mulf %307, %315 : vector<8x128xf32>
    %324 = arith.addf %322, %323 : vector<8x128xf32>
    %325 = math.tanh %324 : vector<8x128xf32>
    %326 = arith.mulf %321, %325 : vector<8x128xf32>
    %327 = arith.addi %13, %c7_i32 : i32
    %328 = vector.broadcast %327 : i32 to vector<8x1xi32>
    %329 = arith.cmpi sgt, %12, %328 : vector<8x1xi32>
    %330 = vector.shape_cast %329 : vector<8x1xi1> to vector<8x1xi1>
    %331 = vector.broadcast %330 : vector<8x1xi1> to vector<8x128xi1>
    %332 = arith.select %331, %326, %292 : vector<8x128xi1>, vector<8x128xf32>
    %333 = vector.shape_cast %329 : vector<8x1xi1> to vector<8x1xi1>
    %334 = vector.broadcast %333 : vector<8x1xi1> to vector<8x128xi1>
    %335 = arith.select %334, %324, %295 : vector<8x128xi1>, vector<8x128xf32>
    %c8_i32_81 = arith.constant 8 : i32
    %c0_82 = arith.constant 0 : index
    %c0_83 = arith.constant 0 : index
    %336 = vector.load %arg7[%c0_82, %c0_83] : memref<8x128xf32, #tpu.memory_space<vmem>>, vector<8x128xf32>
    tpu.vector_store %arg7[%c0_82, %c0_83], %332 {strides = array<i32>} : memref<8x128xf32, #tpu.memory_space<vmem>>, vector<8x128xf32>,
    %c0_84 = arith.constant 0 : index
    %c0_85 = arith.constant 0 : index
    %337 = vector.load %arg8[%c0_84, %c0_85] : memref<8x128xf32, #tpu.memory_space<vmem>>, vector<8x128xf32>
    tpu.vector_store %arg8[%c0_84, %c0_85], %335 {strides = array<i32>} : memref<8x128xf32, #tpu.memory_space<vmem>>, vector<8x128xf32>,
    return
  }
  func.func @transform_0(%arg0: i32, %arg1: i32) -> (i32, i32, i32) {
    %c0_i32 = arith.constant 0 : i32
    %c0_i32_0 = arith.constant 0 : i32
    return %arg1, %arg0, %c0_i32 : i32, i32, i32
  }
  func.func @transform_1(%arg0: i32, %arg1: i32) -> (i32, i32) {
    %c0_i32 = arith.constant 0 : i32
    %c0_i32_0 = arith.constant 0 : i32
    %c0_i32_1 = arith.constant 0 : i32
    return %c0_i32, %c0_i32_0 : i32, i32
  }
  func.func @transform_2(%arg0: i32, %arg1: i32) -> (i32, i32) {
    %c0_i32 = arith.constant 0 : i32
    %c0_i32_0 = arith.constant 0 : i32
    %c0_i32_1 = arith.constant 0 : i32
    return %c0_i32, %c0_i32_0 : i32, i32
  }
  func.func @transform_3(%arg0: i32, %arg1: i32) -> (i32, i32) {
    %c0_i32 = arith.constant 0 : i32
    %c0_i32_0 = arith.constant 0 : i32
    %c0_i32_1 = arith.constant 0 : i32
    return %c0_i32, %c0_i32_0 : i32, i32
  }
  func.func @transform_4(%arg0: i32, %arg1: i32) -> (i32, i32) {
    %c0_i32 = arith.constant 0 : i32
    %c0_i32_0 = arith.constant 0 : i32
    return %arg0, %c0_i32 : i32, i32
  }
  func.func @transform_5(%arg0: i32, %arg1: i32) -> (i32, i32) {
    %c0_i32 = arith.constant 0 : i32
    %c0_i32_0 = arith.constant 0 : i32
    return %arg0, %c0_i32 : i32, i32
  }
}

</mosaic_0001>

<llo_original>
// kernel: tpu_custom_call.1
$region0: #{tpu_custom_call.1}
  #allocation0 [shape = 'u32[]', space=smem, size = 0x4, offset = 0x4, fixed_abs, tag = 'smem constant byte address 0x4 - core index']
  #allocation1 [shape = 'u32[72,128]{1,0:T(1,128)}', space=vmem, size = 0x9000, scoped, tag = 'internal scratch']
  #allocation2 [shape = 'f32[8,128]{1,0:T(8,128)}', space=vmem, size = 0x1000, scoped, tag = 'scratch operand']
  #allocation3 [shape = 'f32[8,8,512]{2,1,0:T(8,128)}', space=vmem, size = 0x20000, scoped, tag = 'scratch operand']
  %s0 = inlined_call_operand.hbm [shape: f32[8,8,128], index: 0, kind: input, shape index: {}]
  %s1 = inlined_call_operand.hbm [shape: f32[128,512], index: 1, kind: input, shape index: {}]
  %s2 = inlined_call_operand.hbm [shape: f32[128,512], index: 2, kind: input, shape index: {}]
  %s3 = inlined_call_operand.vmem [shape: f32[1,512], index: 3, kind: input, shape index: {}]
  %s4 = inlined_call_operand.vmem [shape: s32[8,1], index: 4, kind: input, shape index: {}]
  %s5 = inlined_call_operand.hbm [shape: f32[8,128], index: 5, kind: output, shape index: {}]
  %s6 = sld [smem:[#allocation0]]
  $region46: #{tpu_custom_call.1} parent=0
    _
  %s8 = ssub.s32 1, %s6
  %s9 = scalar_select 0, %s8, %s6
  $region1: #{tpu_custom_call.1} parent=0
    #allocation4 [shape = 'u8[32768]{0}', space=vmem, size = 0x8000, scoped, tag = 'input window, operand 0, single buffered']
    #allocation5 [shape = 's32[1]{0}', space=sflag, size = 0x4, scoped, tag = 'scoped memory for tpu_custom_call.1']
    #allocation6 [shape = 's32[1]{0}', space=sflag, size = 0x4, scoped, tag = 'scoped memory for tpu_custom_call.1']
    #allocation7 [shape = 'u8[262144]{0}', space=vmem, size = 0x40000, scoped, tag = 'input window, operand 1, single buffered']
    #allocation8 [shape = 's32[1]{0}', space=sflag, size = 0x4, scoped, tag = 'scoped memory for tpu_custom_call.1']
    #allocation9 [shape = 'u8[262144]{0}', space=vmem, size = 0x40000, scoped, tag = 'input window, operand 2, single buffered']
    #allocation10 [shape = 'u8[4096]{0}', space=vmem, size = 0x1000, scoped, tag = 'output window, operand 0, single buffered']
    %10 = vsyncpa [#allocation5], 0
    %11 = vsyncpa [#allocation8], 0
    %12 = vsyncpa [#allocation6], 0
    // Predicated region
    $region2: #{tpu_custom_call.1} parent=1 // pred_check
      _
    $region3: #{tpu_custom_call.1} parent=1 // pred_check_branch
      %14 = sbr.rel (0) target = $region5
    $region4: #{tpu_custom_call.1} parent=1 // pred_region
      %16 = vsyncadd [#allocation5], 0
      %s17 = sshll.u32 %s0, 4
      %s18 = int_to_ptr.hbm [resolvable:$true] %s17
      %s19 = sshll.u32 [#allocation4], 4
      %s20 = int_to_ptr.vmem [resolvable:$true] %s19
      %25 = dma.hbm_to_vmem [thread:$0]  %s18, 1024, %s20, [#allocation5], 128, 128, 8
    $region5: #{tpu_custom_call.1} parent=1 // pred_fallthru
      _
    // Predicated region
    $region6: #{tpu_custom_call.1} parent=1 // pred_check
      _
    $region7: #{tpu_custom_call.1} parent=1 // pred_check_branch
      %27 = sbr.rel (0) target = $region9
    $region8: #{tpu_custom_call.1} parent=1 // pred_region
      %29 = vsyncadd [#allocation8], 0
      %s30 = sshll.u32 %s1, 4
      %s31 = int_to_ptr.hbm [resolvable:$true] %s30
      %s32 = sshll.u32 [#allocation7], 4
      %s33 = int_to_ptr.vmem [resolvable:$true] %s32
      %38 = dma.hbm_to_vmem [thread:$0]  %s31, 8192, %s33, [#allocation8], 512, 512, 32
    $region9: #{tpu_custom_call.1} parent=1 // pred_fallthru
      _
    // Predicated region
    $region10: #{tpu_custom_call.1} parent=1 // pred_check
      _
    $region11: #{tpu_custom_call.1} parent=1 // pred_check_branch
      %40 = sbr.rel (0) target = $region13
    $region12: #{tpu_custom_call.1} parent=1 // pred_region
      %42 = vsyncadd [#allocation8], 0
      %s43 = sshll.u32 %s2, 4
      %s44 = int_to_ptr.hbm [resolvable:$true] %s43
      %s45 = sshll.u32 [#allocation9], 4
      %s46 = int_to_ptr.vmem [resolvable:$true] %s45
      %51 = dma.hbm_to_vmem [thread:$0]  %s44, 8192, %s46, [#allocation8], 512, 512, 32
    $region13: #{tpu_custom_call.1} parent=1 // pred_fallthru
      _
    // Predicated region
    $region14: #{tpu_custom_call.1} parent=1 // pred_check
      _
    $region15: #{tpu_custom_call.1} parent=1 // pred_check_branch
      %53 = sbr.rel (0) target = $region17
    $region16: #{tpu_custom_call.1} parent=1 // pred_region
      _
    $region17: #{tpu_custom_call.1} parent=1 // pred_fallthru
      _
    // Predicated region
    $region18: #{tpu_custom_call.1} parent=1 // pred_check
      _
    $region19: #{tpu_custom_call.1} parent=1 // pred_check_branch
      %55 = sbr.rel (0) target = $region21
    $region20: #{tpu_custom_call.1} parent=1 // pred_region
      _
    $region21: #{tpu_custom_call.1} parent=1 // pred_fallthru
      _
    // Predicated region
    $region22: #{tpu_custom_call.1} parent=1 // pred_check
      _
    $region23: #{tpu_custom_call.1} parent=1 // pred_check_branch
      %57 = sbr.rel (0) target = $region25
    $region24: #{tpu_custom_call.1} parent=1 // pred_region
      %59 = dma.done [#allocation5], 1024
    $region25: #{tpu_custom_call.1} parent=1 // pred_fallthru
      _
    // Predicated region
    $region26: #{tpu_custom_call.1} parent=1 // pred_check
      _
    $region27: #{tpu_custom_call.1} parent=1 // pred_check_branch
      %61 = sbr.rel (0) target = $region29
    $region28: #{tpu_custom_call.1} parent=1 // pred_region
      %63 = dma.done [#allocation8], 8192
    $region29: #{tpu_custom_call.1} parent=1 // pred_fallthru
      _
    // Predicated region
    $region30: #{tpu_custom_call.1} parent=1 // pred_check
      _
    $region31: #{tpu_custom_call.1} parent=1 // pred_check_branch
      %65 = sbr.rel (0) target = $region33
    $region32: #{tpu_custom_call.1} parent=1 // pred_region
      %67 = dma.done [#allocation8], 8192
    $region33: #{tpu_custom_call.1} parent=1 // pred_fallthru
      _
    %p68 = scmp.eq.s32.totalorder 0, 0
    // Predicated region
    $region34: #{tpu_custom_call.1} parent=1 // pred_check
      %p69 = pneg %p68
    $region35: #{tpu_custom_call.1} parent=1 // pred_check_branch
      %71 = sbr.rel (%p69) target = $region37
    $region36: #{tpu_custom_call.1} parent=1 // pred_region
      %72 = vst [vmem:[#allocation10] sm:$0xff] 0.0
      %73 = vst [vmem:[#allocation2] sm:$0xff] 0.0
    $region37: #{tpu_custom_call.1} parent=1 // pred_fallthru
      _
    %v74 = vld [vmem:[#allocation4] sm:$0xff]
    %v75 = vld [vmem:[#allocation4 + $0x8] sm:$0xff]
    %v76 = vld [vmem:[#allocation4 + $0x10] sm:$0xff]
    %v77 = vld [vmem:[#allocation4 + $0x18] sm:$0xff]
    %v78 = vld [vmem:[#allocation4 + $0x20] sm:$0xff]
    %v79 = vld [vmem:[#allocation4 + $0x28] sm:$0xff]
    %v80 = vld [vmem:[#allocation4 + $0x30] sm:$0xff]
    %v81 = vld [vmem:[#allocation4 + $0x38] sm:$0xff]
    %v82 = vld [vmem:[#allocation7] sm:$0xff]
    %v83 = vld [vmem:[#allocation7 + $0x8] sm:$0xff]
    %v84 = vld [vmem:[#allocation7 + $0x10] sm:$0xff]
    %v85 = vld [vmem:[#allocation7 + $0x18] sm:$0xff]
    %v86 = vld [vmem:[#allocation7 + $0x20] sm:$0xff]
    %v87 = vld [vmem:[#allocation7 + $0x28] sm:$0xff]
    %v88 = vld [vmem:[#allocation7 + $0x30] sm:$0xff]
    %v89 = vld [vmem:[#allocation7 + $0x38] sm:$0xff]
    %v90 = vld [vmem:[#allocation7 + $0x40] sm:$0xff]
    %v91 = vld [vmem:[#allocation7 + $0x48] sm:$0xff]
    %v92 = vld [vmem:[#allocation7 + $0x50] sm:$0xff]
    %v93 = vld [vmem:[#allocation7 + $0x58] sm:$0xff]
    %v94 = vld [vmem:[#allocation7 + $0x60] sm:$0xff]
    %v95 = vld [vmem:[#allocation7 + $0x68] sm:$0xff]
    %v96 = vld [vmem:[#allocation7 + $0x70] sm:$0xff]
    %v97 = vld [vmem:[#allocation7 + $0x78] sm:$0xff]
    %v98 = vld [vmem:[#allocation7 + $0x80] sm:$0xff]
    %v99 = vld [vmem:[#allocation7 + $0x88] sm:$0xff]
    %v100 = vld [vmem:[#allocation7 + $0x90] sm:$0xff]
    %v101 = vld [vmem:[#allocation7 + $0x98] sm:$0xff]
    %v102 = vld [vmem:[#allocation7 + $0xa0] sm:$0xff]
    %v103 = vld [vmem:[#allocation7 + $0xa8] sm:$0xff]
    %v104 = vld [vmem:[#allocation7 + $0xb0] sm:$0xff]
    %v105 = vld [vmem:[#allocation7 + $0xb8] sm:$0xff]
    %v106 = vld [vmem:[#allocation7 + $0xc0] sm:$0xff]
    %v107 = vld [vmem:[#allocation7 + $0xc8] sm:$0xff]
    %v108 = vld [vmem:[#allocation7 + $0xd0] sm:$0xff]
    %v109 = vld [vmem:[#allocation7 + $0xd8] sm:$0xff]
    %v110 = vld [vmem:[#allocation7 + $0xe0] sm:$0xff]
    %v111 = vld [vmem:[#allocation7 + $0xe8] sm:$0xff]
    %v112 = vld [vmem:[#allocation7 + $0xf0] sm:$0xff]
    %v113 = vld [vmem:[#allocation7 + $0xf8] sm:$0xff]
    %v114 = vld [vmem:[#allocation7 + $0x100] sm:$0xff]
    %v115 = vld [vmem:[#allocation7 + $0x108] sm:$0xff]
    %v116 = vld [vmem:[#allocation7 + $0x110] sm:$0xff]
    %v117 = vld [vmem:[#allocation7 + $0x118] sm:$0xff]
    %v118 = vld [vmem:[#allocation7 + $0x120] sm:$0xff]
    %v119 = vld [vmem:[#allocation7 + $0x128] sm:$0xff]
    %v120 = vld [vmem:[#allocation7 + $0x130] sm:$0xff]
    %v121 = vld [vmem:[#allocation7 + $0x138] sm:$0xff]
    %v122 = vld [vmem:[#allocation7 + $0x140] sm:$0xff]
    %v123 = vld [vmem:[#allocation7 + $0x148] sm:$0xff]
    %v124 = vld [vmem:[#allocation7 + $0x150] sm:$0xff]
    %v125 = vld [vmem:[#allocation7 + $0x158] sm:$0xff]
    %v126 = vld [vmem:[#allocation7 + $0x160] sm:$0xff]
    %v127 = vld [vmem:[#allocation7 + $0x168] sm:$0xff]
    %v128 = vld [vmem:[#allocation7 + $0x170] sm:$0xff]
    %v129 = vld [vmem:[#allocation7 + $0x178] sm:$0xff]
    %v130 = vld [vmem:[#allocation7 + $0x180] sm:$0xff]
    %v131 = vld [vmem:[#allocation7 + $0x188] sm:$0xff]
    %v132 = vld [vmem:[#allocation7 + $0x190] sm:$0xff]
    %v133 = vld [vmem:[#allocation7 + $0x198] sm:$0xff]
    %v134 = vld [vmem:[#allocation7 + $0x1a0] sm:$0xff]
    %v135 = vld [vmem:[#allocation7 + $0x1a8] sm:$0xff]
    %v136 = vld [vmem:[#allocation7 + $0x1b0] sm:$0xff]
    %v137 = vld [vmem:[#allocation7 + $0x1b8] sm:$0xff]
    %v138 = vld [vmem:[#allocation7 + $0x1c0] sm:$0xff]
    %v139 = vld [vmem:[#allocation7 + $0x1c8] sm:$0xff]
    %v140 = vld [vmem:[#allocation7 + $0x1d0] sm:$0xff]
    %v141 = vld [vmem:[#allocation7 + $0x1d8] sm:$0xff]
    %v142 = vld [vmem:[#allocation7 + $0x1e0] sm:$0xff]
    %v143 = vld [vmem:[#allocation7 + $0x1e8] sm:$0xff]
    %v144 = vld [vmem:[#allocation7 + $0x1f0] sm:$0xff]
    %v145 = vld [vmem:[#allocation7 + $0x1f8] sm:$0xff]
    %v146 = vld [vmem:[%s3] sm:$0xf]
    %v148 = vperm.slane %v146, 0
    %v149 = vperm.slane %v146, 1
    %v150 = vperm.slane %v146, 2
    %v151 = vperm.slane %v146, 3
    %156 = vmatpush.msra.mxu0 %v142
    %157 = vmatpush.msra.mxu0 %v138
    %158 = vmatpush.msra.mxu0 %v134
    %159 = vmatpush.msra.mxu0 %v130
    %160 = vmatpush.msra.mxu0 %v126
    %161 = vmatpush.msra.mxu0 %v122
    %162 = vmatpush.msra.mxu0 %v118
    %163 = vmatpush.msra.mxu0 %v114
    %164 = vmatpush.msra.mxu0 %v110
    %165 = vmatpush.msra.mxu0 %v106
    %166 = vmatpush.msra.mxu0 %v102
    %167 = vmatpush.msra.mxu0 %v98
    %168 = vmatpush.msra.mxu0 %v94
    %169 = vmatpush.msra.mxu0 %v90
    %170 = vmatpush.msra.mxu0 %v86
    %171 = vmatpush.msra.mxu0 %v82
    %172 = vmatmul.f32.gmra.mxu0 %v74
    %v173 = vpop.f32.mrf.mxu0
    %v174 = vadd.f32 %v148, %v173
    %175 = vmatmul.f32.gmra.mxu0 %v75
    %v176 = vpop.f32.mrf.mxu0
    %v177 = vadd.f32 %v148, %v176
    %178 = vmatmul.f32.gmra.mxu0 %v76
    %v179 = vpop.f32.mrf.mxu0
    %v180 = vadd.f32 %v148, %v179
    %181 = vmatmul.f32.gmra.mxu0 %v77
    %v182 = vpop.f32.mrf.mxu0
    %v183 = vadd.f32 %v148, %v182
    %184 = vmatmul.f32.gmra.mxu0 %v78
    %v185 = vpop.f32.mrf.mxu0
    %v186 = vadd.f32 %v148, %v185
    %187 = vmatmul.f32.gmra.mxu0 %v79
    %v188 = vpop.f32.mrf.mxu0
    %v189 = vadd.f32 %v148, %v188
    %190 = vmatmul.f32.gmra.mxu0 %v80
    %v191 = vpop.f32.mrf.mxu0
    %v192 = vadd.f32 %v148, %v191
    %193 = vmatmul.f32.gmra.mxu0 %v81
    %v194 = vpop.f32.mrf.mxu0
    %v195 = vadd.f32 %v148, %v194
    %196 = vdwg.mxu0
    %197 = vmatpush.msra.mxu0 %v143
    %198 = vmatpush.msra.mxu0 %v139
    %199 = vmatpush.msra.mxu0 %v135
    %200 = vmatpush.msra.mxu0 %v131
    %201 = vmatpush.msra.mxu0 %v127
    %202 = vmatpush.msra.mxu0 %v123
    %203 = vmatpush.msra.mxu0 %v119
    %204 = vmatpush.msra.mxu0 %v115
    %205 = vmatpush.msra.mxu0 %v111
    %206 = vmatpush.msra.mxu0 %v107
    %207 = vmatpush.msra.mxu0 %v103
    %208 = vmatpush.msra.mxu0 %v99
    %209 = vmatpush.msra.mxu0 %v95
    %210 = vmatpush.msra.mxu0 %v91
    %211 = vmatpush.msra.mxu0 %v87
    %212 = vmatpush.msra.mxu0 %v83
    %213 = vmatmul.f32.gmra.mxu0 %v74
    %v214 = vpop.f32.mrf.mxu0
    %v215 = vadd.f32 %v149, %v214
    %216 = vmatmul.f32.gmra.mxu0 %v75
    %v217 = vpop.f32.mrf.mxu0
    %v218 = vadd.f32 %v149, %v217
    %219 = vmatmul.f32.gmra.mxu0 %v76
    %v220 = vpop.f32.mrf.mxu0
    %v221 = vadd.f32 %v149, %v220
    %222 = vmatmul.f32.gmra.mxu0 %v77
    %v223 = vpop.f32.mrf.mxu0
    %v224 = vadd.f32 %v149, %v223
    %225 = vmatmul.f32.gmra.mxu0 %v78
    %v226 = vpop.f32.mrf.mxu0
    %v227 = vadd.f32 %v149, %v226
    %228 = vmatmul.f32.gmra.mxu0 %v79
    %v229 = vpop.f32.mrf.mxu0
    %v230 = vadd.f32 %v149, %v229
    %231 = vmatmul.f32.gmra.mxu0 %v80
    %v232 = vpop.f32.mrf.mxu0
    %v233 = vadd.f32 %v149, %v232
    %234 = vmatmul.f32.gmra.mxu0 %v81
    %v235 = vpop.f32.mrf.mxu0
    %v236 = vadd.f32 %v149, %v235
    %237 = vdwg.mxu0
    %238 = vmatpush.msra.mxu0 %v144
    %239 = vmatpush.msra.mxu0 %v140
    %240 = vmatpush.msra.mxu0 %v136
    %241 = vmatpush.msra.mxu0 %v132
    %242 = vmatpush.msra.mxu0 %v128
    %243 = vmatpush.msra.mxu0 %v124
    %244 = vmatpush.msra.mxu0 %v120
    %245 = vmatpush.msra.mxu0 %v116
    %246 = vmatpush.msra.mxu0 %v112
    %247 = vmatpush.msra.mxu0 %v108
    %248 = vmatpush.msra.mxu0 %v104
    %249 = vmatpush.msra.mxu0 %v100
    %250 = vmatpush.msra.mxu0 %v96
    %251 = vmatpush.msra.mxu0 %v92
    %252 = vmatpush.msra.mxu0 %v88
    %253 = vmatpush.msra.mxu0 %v84
    %254 = vmatmul.f32.gmra.mxu0 %v74
    %v255 = vpop.f32.mrf.mxu0
    %v256 = vadd.f32 %v150, %v255
    %257 = vmatmul.f32.gmra.mxu0 %v75
    %v258 = vpop.f32.mrf.mxu0
    %v259 = vadd.f32 %v150, %v258
    %260 = vmatmul.f32.gmra.mxu0 %v76
    %v261 = vpop.f32.mrf.mxu0
    %v262 = vadd.f32 %v150, %v261
    %263 = vmatmul.f32.gmra.mxu0 %v77
    %v264 = vpop.f32.mrf.mxu0
    %v265 = vadd.f32 %v150, %v264
    %266 = vmatmul.f32.gmra.mxu0 %v78
    %v267 = vpop.f32.mrf.mxu0
    %v268 = vadd.f32 %v150, %v267
    %269 = vmatmul.f32.gmra.mxu0 %v79
    %v270 = vpop.f32.mrf.mxu0
    %v271 = vadd.f32 %v150, %v270
    %272 = vmatmul.f32.gmra.mxu0 %v80
    %v273 = vpop.f32.mrf.mxu0
    %v274 = vadd.f32 %v150, %v273
    %275 = vmatmul.f32.gmra.mxu0 %v81
    %v276 = vpop.f32.mrf.mxu0
    %v277 = vadd.f32 %v150, %v276
    %278 = vdwg.mxu0
    %279 = vmatpush.msra.mxu0 %v145
    %280 = vmatpush.msra.mxu0 %v141
    %281 = vmatpush.msra.mxu0 %v137
    %282 = vmatpush.msra.mxu0 %v133
    %283 = vmatpush.msra.mxu0 %v129
    %284 = vmatpush.msra.mxu0 %v125
    %285 = vmatpush.msra.mxu0 %v121
    %286 = vmatpush.msra.mxu0 %v117
    %287 = vmatpush.msra.mxu0 %v113
    %288 = vmatpush.msra.mxu0 %v109
    %289 = vmatpush.msra.mxu0 %v105
    %290 = vmatpush.msra.mxu0 %v101
    %291 = vmatpush.msra.mxu0 %v97
    %292 = vmatpush.msra.mxu0 %v93
    %293 = vmatpush.msra.mxu0 %v89
    %294 = vmatpush.msra.mxu0 %v85
    %295 = vmatmul.f32.gmra.mxu0 %v74
    %v296 = vpop.f32.mrf.mxu0
    %v297 = vadd.f32 %v151, %v296
    %298 = vmatmul.f32.gmra.mxu0 %v75
    %v299 = vpop.f32.mrf.mxu0
    %v300 = vadd.f32 %v151, %v299
    %301 = vmatmul.f32.gmra.mxu0 %v76
    %v302 = vpop.f32.mrf.mxu0
    %v303 = vadd.f32 %v151, %v302
    %304 = vmatmul.f32.gmra.mxu0 %v77
    %v305 = vpop.f32.mrf.mxu0
    %v306 = vadd.f32 %v151, %v305
    %307 = vmatmul.f32.gmra.mxu0 %v78
    %v308 = vpop.f32.mrf.mxu0
    %v309 = vadd.f32 %v151, %v308
    %310 = vmatmul.f32.gmra.mxu0 %v79
    %v311 = vpop.f32.mrf.mxu0
    %v312 = vadd.f32 %v151, %v311
    %313 = vmatmul.f32.gmra.mxu0 %v80
    %v314 = vpop.f32.mrf.mxu0
    %v315 = vadd.f32 %v151, %v314
    %316 = vmatmul.f32.gmra.mxu0 %v81
    %v317 = vpop.f32.mrf.mxu0
    %v318 = vadd.f32 %v151, %v317
    %319 = vdwg.mxu0
    %320 = vst [vmem:[#allocation3] sm:$0xff] %v174
    %321 = vst [vmem:[#allocation3 + $0x8] sm:$0xff] %v215
    %322 = vst [vmem:[#allocation3 + $0x10] sm:$0xff] %v256
    %323 = vst [vmem:[#allocation3 + $0x18] sm:$0xff] %v297
    %324 = vst [vmem:[#allocation3 + $0x20] sm:$0xff] %v177
    %325 = vst [vmem:[#allocation3 + $0x28] sm:$0xff] %v218
    %326 = vst [vmem:[#allocation3 + $0x30] sm:$0xff] %v259
    %327 = vst [vmem:[#allocation3 + $0x38] sm:$0xff] %v300
    %328 = vst [vmem:[#allocation3 + $0x40] sm:$0xff] %v180
    %329 = vst [vmem:[#allocation3 + $0x48] sm:$0xff] %v221
    %330 = vst [vmem:[#allocation3 + $0x50] sm:$0xff] %v262
    %331 = vst [vmem:[#allocation3 + $0x58] sm:$0xff] %v303
    %332 = vst [vmem:[#allocation3 + $0x60] sm:$0xff] %v183
    %333 = vst [vmem:[#allocation3 + $0x68] sm:$0xff] %v224
    %334 = vst [vmem:[#allocation3 + $0x70] sm:$0xff] %v265
    %335 = vst [vmem:[#allocation3 + $0x78] sm:$0xff] %v306
    %336 = vst [vmem:[#allocation3 + $0x80] sm:$0xff] %v186
    %337 = vst [vmem:[#allocation3 + $0x88] sm:$0xff] %v227
    %338 = vst [vmem:[#allocation3 + $0x90] sm:$0xff] %v268
    %339 = vst [vmem:[#allocation3 + $0x98] sm:$0xff] %v309
    %340 = vst [vmem:[#allocation3 + $0xa0] sm:$0xff] %v189
    %341 = vst [vmem:[#allocation3 + $0xa8] sm:$0xff] %v230
    %342 = vst [vmem:[#allocation3 + $0xb0] sm:$0xff] %v271
    %343 = vst [vmem:[#allocation3 + $0xb8] sm:$0xff] %v312
    %344 = vst [vmem:[#allocation3 + $0xc0] sm:$0xff] %v192
    %345 = vst [vmem:[#allocation3 + $0xc8] sm:$0xff] %v233
    %346 = vst [vmem:[#allocation3 + $0xd0] sm:$0xff] %v274
    %347 = vst [vmem:[#allocation3 + $0xd8] sm:$0xff] %v315
    %348 = vst [vmem:[#allocation3 + $0xe0] sm:$0xff] %v195
    %349 = vst [vmem:[#allocation3 + $0xe8] sm:$0xff] %v236
    %350 = vst [vmem:[#allocation3 + $0xf0] sm:$0xff] %v277
    %351 = vst [vmem:[#allocation3 + $0xf8] sm:$0xff] %v318
    %v352 = vld [vmem:[%s4] sm:$0xff]
    %s353 = smul.u32 0, 8
    %v354 = vld [vmem:[#allocation10] sm:$0xff]
    %v355 = vld [vmem:[#allocation2] sm:$0xff]
    %v356 = vld [vmem:[#allocation3] sm:$0xff]
    %v357 = vld [vmem:[#allocation3 + $0x8] sm:$0xff]
    %v358 = vld [vmem:[#allocation3 + $0x10] sm:$0xff]
    %v359 = vld [vmem:[#allocation3 + $0x18] sm:$0xff]
    %v360 = vld [vmem:[#allocation9] sm:$0xff]
    %v361 = vld [vmem:[#allocation9 + $0x8] sm:$0xff]
    %v362 = vld [vmem:[#allocation9 + $0x10] sm:$0xff]
    %v363 = vld [vmem:[#allocation9 + $0x18] sm:$0xff]
    %v364 = vld [vmem:[#allocation9 + $0x20] sm:$0xff]
    %v365 = vld [vmem:[#allocation9 + $0x28] sm:$0xff]
    %v366 = vld [vmem:[#allocation9 + $0x30] sm:$0xff]
    %v367 = vld [vmem:[#allocation9 + $0x38] sm:$0xff]
    %v368 = vld [vmem:[#allocation9 + $0x40] sm:$0xff]
    %v369 = vld [vmem:[#allocation9 + $0x48] sm:$0xff]
    %v370 = vld [vmem:[#allocation9 + $0x50] sm:$0xff]
    %v371 = vld [vmem:[#allocation9 + $0x58] sm:$0xff]
    %v372 = vld [vmem:[#allocation9 + $0x60] sm:$0xff]
    %v373 = vld [vmem:[#allocation9 + $0x68] sm:$0xff]
    %v374 = vld [vmem:[#allocation9 + $0x70] sm:$0xff]
    %v375 = vld [vmem:[#allocation9 + $0x78] sm:$0xff]
    %v376 = vld [vmem:[#allocation9 + $0x80] sm:$0xff]
    %v377 = vld [vmem:[#allocation9 + $0x88] sm:$0xff]
    %v378 = vld [vmem:[#allocation9 + $0x90] sm:$0xff]
    %v379 = vld [vmem:[#allocation9 + $0x98] sm:$0xff]
    %v380 = vld [vmem:[#allocation9 + $0xa0] sm:$0xff]
    %v381 = vld [vmem:[#allocation9 + $0xa8] sm:$0xff]
    %v382 = vld [vmem:[#allocation9 + $0xb0] sm:$0xff]
    %v383 = vld [vmem:[#allocation9 + $0xb8] sm:$0xff]
    %v384 = vld [vmem:[#allocation9 + $0xc0] sm:$0xff]
    %v385 = vld [vmem:[#allocation9 + $0xc8] sm:$0xff]
    %v386 = vld [vmem:[#allocation9 + $0xd0] sm:$0xff]
    %v387 = vld [vmem:[#allocation9 + $0xd8] sm:$0xff]
    %v388 = vld [vmem:[#allocation9 + $0xe0] sm:$0xff]
    %v389 = vld [vmem:[#allocation9 + $0xe8] sm:$0xff]
    %v390 = vld [vmem:[#allocation9 + $0xf0] sm:$0xff]
    %v391 = vld [vmem:[#allocation9 + $0xf8] sm:$0xff]
    %v392 = vld [vmem:[#allocation9 + $0x100] sm:$0xff]
    %v393 = vld [vmem:[#allocation9 + $0x108] sm:$0xff]
    %v394 = vld [vmem:[#allocation9 + $0x110] sm:$0xff]
    %v395 = vld [vmem:[#allocation9 + $0x118] sm:$0xff]
    %v396 = vld [vmem:[#allocation9 + $0x120] sm:$0xff]
    %v397 = vld [vmem:[#allocation9 + $0x128] sm:$0xff]
    %v398 = vld [vmem:[#allocation9 + $0x130] sm:$0xff]
    %v399 = vld [vmem:[#allocation9 + $0x138] sm:$0xff]
    %v400 = vld [vmem:[#allocation9 + $0x140] sm:$0xff]
    %v401 = vld [vmem:[#allocation9 + $0x148] sm:$0xff]
    %v402 = vld [vmem:[#allocation9 + $0x150] sm:$0xff]
    %v403 = vld [vmem:[#allocation9 + $0x158] sm:$0xff]
    %v404 = vld [vmem:[#allocation9 + $0x160] sm:$0xff]
    %v405 = vld [vmem:[#allocation9 + $0x168] sm:$0xff]
    %v406 = vld [vmem:[#allocation9 + $0x170] sm:$0xff]
    %v407 = vld [vmem:[#allocation9 + $0x178] sm:$0xff]
    %v408 = vld [vmem:[#allocation9 + $0x180] sm:$0xff]
    %v409 = vld [vmem:[#allocation9 + $0x188] sm:$0xff]
    %v410 = vld [vmem:[#allocation9 + $0x190] sm:$0xff]
    %v411 = vld [vmem:[#allocation9 + $0x198] sm:$0xff]
    %v412 = vld [vmem:[#allocation9 + $0x1a0] sm:$0xff]
    %v413 = vld [vmem:[#allocation9 + $0x1a8] sm:$0xff]
    %v414 = vld [vmem:[#allocation9 + $0x1b0] sm:$0xff]
    %v415 = vld [vmem:[#allocation9 + $0x1b8] sm:$0xff]
    %v416 = vld [vmem:[#allocation9 + $0x1c0] sm:$0xff]
    %v417 = vld [vmem:[#allocation9 + $0x1c8] sm:$0xff]
    %v418 = vld [vmem:[#allocation9 + $0x1d0] sm:$0xff]
    %v419 = vld [vmem:[#allocation9 + $0x1d8] sm:$0xff]
    %v420 = vld [vmem:[#allocation9 + $0x1e0] sm:$0xff]
    %v421 = vld [vmem:[#allocation9 + $0x1e8] sm:$0xff]
    %v422 = vld [vmem:[#allocation9 + $0x1f0] sm:$0xff]
    %v423 = vld [vmem:[#allocation9 + $0x1f8] sm:$0xff]
    %424 = vmatpush.msra.mxu0 %v420
    %425 = vmatpush.msra.mxu0 %v416
    %426 = vmatpush.msra.mxu0 %v412
    %427 = vmatpush.msra.mxu0 %v408
    %428 = vmatpush.msra.mxu0 %v404
    %429 = vmatpush.msra.mxu0 %v400
    %430 = vmatpush.msra.mxu0 %v396
    %431 = vmatpush.msra.mxu0 %v392
    %432 = vmatpush.msra.mxu0 %v388
    %433 = vmatpush.msra.mxu0 %v384
    %434 = vmatpush.msra.mxu0 %v380
    %435 = vmatpush.msra.mxu0 %v376
    %436 = vmatpush.msra.mxu0 %v372
    %437 = vmatpush.msra.mxu0 %v368
    %438 = vmatpush.msra.mxu0 %v364
    %439 = vmatpush.msra.mxu0 %v360
    %440 = vmatmul.f32.gmra.mxu0 %v354
    %v441 = vpop.f32.mrf.mxu0
    %v442 = vadd.f32 0.0, %v441
    %443 = vdwg.mxu0
    %444 = vmatpush.msra.mxu0 %v421
    %445 = vmatpush.msra.mxu0 %v417
    %446 = vmatpush.msra.mxu0 %v413
    %447 = vmatpush.msra.mxu0 %v409
    %448 = vmatpush.msra.mxu0 %v405
    %449 = vmatpush.msra.mxu0 %v401
    %450 = vmatpush.msra.mxu0 %v397
    %451 = vmatpush.msra.mxu0 %v393
    %452 = vmatpush.msra.mxu0 %v389
    %453 = vmatpush.msra.mxu0 %v385
    %454 = vmatpush.msra.mxu0 %v381
    %455 = vmatpush.msra.mxu0 %v377
    %456 = vmatpush.msra.mxu0 %v373
    %457 = vmatpush.msra.mxu0 %v369
    %458 = vmatpush.msra.mxu0 %v365
    %459 = vmatpush.msra.mxu0 %v361
    %460 = vmatmul.f32.gmra.mxu0 %v354
    %v461 = vpop.f32.mrf.mxu0
    %v462 = vadd.f32 0.0, %v461
    %463 = vdwg.mxu0
    %464 = vmatpush.msra.mxu0 %v422
    %465 = vmatpush.msra.mxu0 %v418
    %466 = vmatpush.msra.mxu0 %v414
    %467 = vmatpush.msra.mxu0 %v410
    %468 = vmatpush.msra.mxu0 %v406
    %469 = vmatpush.msra.mxu0 %v402
    %470 = vmatpush.msra.mxu0 %v398
    %471 = vmatpush.msra.mxu0 %v394
    %472 = vmatpush.msra.mxu0 %v390
    %473 = vmatpush.msra.mxu0 %v386
    %474 = vmatpush.msra.mxu0 %v382
    %475 = vmatpush.msra.mxu0 %v378
    %476 = vmatpush.msra.mxu0 %v374
    %477 = vmatpush.msra.mxu0 %v370
    %478 = vmatpush.msra.mxu0 %v366
    %479 = vmatpush.msra.mxu0 %v362
    %480 = vmatmul.f32.gmra.mxu0 %v354
    %v481 = vpop.f32.mrf.mxu0
    %v482 = vadd.f32 0.0, %v481
    %483 = vdwg.mxu0
    %484 = vmatpush.msra.mxu0 %v423
    %485 = vmatpush.msra.mxu0 %v419
    %486 = vmatpush.msra.mxu0 %v415
    %487 = vmatpush.msra.mxu0 %v411
    %488 = vmatpush.msra.mxu0 %v407
    %489 = vmatpush.msra.mxu0 %v403
    %490 = vmatpush.msra.mxu0 %v399
    %491 = vmatpush.msra.mxu0 %v395
    %492 = vmatpush.msra.mxu0 %v391
    %493 = vmatpush.msra.mxu0 %v387
    %494 = vmatpush.msra.mxu0 %v383
    %495 = vmatpush.msra.mxu0 %v379
    %496 = vmatpush.msra.mxu0 %v375
    %497 = vmatpush.msra.mxu0 %v371
    %498 = vmatpush.msra.mxu0 %v367
    %499 = vmatpush.msra.mxu0 %v363
    %500 = vmatmul.f32.gmra.mxu0 %v354
    %v501 = vpop.f32.mrf.mxu0
    %v502 = vadd.f32 0.0, %v501
    %503 = vdwg.mxu0
    %v504 = vadd.f32 %v356, %v442
    %v505 = vadd.f32 %v357, %v462
    %v506 = vadd.f32 %v358, %v482
    %v507 = vadd.f32 %v359, %v502
    %v508 = vxor.u32 %v504, 2147483648
    %v509 = vmul.f32 %v508, 1.442695
    %v510 = vpow.pop %v509
    %v511 = vadd.f32 %v510, 1.0
    %v512 = vrcp.pop %v511
    %v513 = vmul.f32 %v511, %v512
    %v514 = vsub.f32 1.0, %v513
    %v515 = vmul.f32 %v512, %v514
    %v516 = vadd.f32 %v512, %v515
    %vm517 = vweird.f32 %v511
    %vm518 = vweird.f32 %v512
    %vm519 = vmor %vm517, %vm518
    %v520 = vsel %vm519, %v512, %v516
    %v521 = vand.u32 2147483647, %v511
    %vm522 = vcmp.eq.f32.partialorder %v521, 8.507059e+37
    %v523 = vand.u32 %v511, 2147483648
    %v524 = vor.u32 1.1754944e-38, %v523
    %v525 = vsel %vm522, %v524, %v520
    %v526 = vmul.f32 1.0, %v525
    %v527 = vxor.u32 %v505, 2147483648
    %v528 = vmul.f32 %v527, 1.442695
    %v529 = vpow.pop %v528
    %v530 = vadd.f32 %v529, 1.0
    %v531 = vrcp.pop %v530
    %v532 = vmul.f32 %v530, %v531
    %v533 = vsub.f32 1.0, %v532
    %v534 = vmul.f32 %v531, %v533
    %v535 = vadd.f32 %v531, %v534
    %vm536 = vweird.f32 %v530
    %vm537 = vweird.f32 %v531
    %vm538 = vmor %vm536, %vm537
    %v539 = vsel %vm538, %v531, %v535
    %v540 = vand.u32 2147483647, %v530
    %vm541 = vcmp.eq.f32.partialorder %v540, 8.507059e+37
    %v542 = vand.u32 %v530, 2147483648
    %v543 = vor.u32 1.1754944e-38, %v542
    %v544 = vsel %vm541, %v543, %v539
    %v545 = vmul.f32 1.0, %v544
    %v546 = vtanh.pop %v506
    %v547 = vxor.u32 %v507, 2147483648
    %v548 = vmul.f32 %v547, 1.442695
    %v549 = vpow.pop %v548
    %v550 = vadd.f32 %v549, 1.0
    %v551 = vrcp.pop %v550
    %v552 = vmul.f32 %v550, %v551
    %v553 = vsub.f32 1.0, %v552
    %v554 = vmul.f32 %v551, %v553
    %v555 = vadd.f32 %v551, %v554
    %vm556 = vweird.f32 %v550
    %vm557 = vweird.f32 %v551
    %vm558 = vmor %vm556, %vm557
    %v559 = vsel %vm558, %v551, %v555
    %v560 = vand.u32 2147483647, %v550
    %vm561 = vcmp.eq.f32.partialorder %v560, 8.507059e+37
    %v562 = vand.u32 %v550, 2147483648
    %v563 = vor.u32 1.1754944e-38, %v562
    %v564 = vsel %vm561, %v563, %v559
    %v565 = vmul.f32 1.0, %v564
    %v566 = vmul.f32 %v545, %v355
    %v567 = vmul.f32 %v526, %v546
    %v568 = vadd.f32 %v566, %v567
    %v569 = vtanh.pop %v568
    %v570 = vmul.f32 %v565, %v569
    %v571 = vstv %s353
    %vm572 = vcmp.gt.s32.totalorder %v352, %v571
    %v573 = vsel %vm572, 1, 0
    %574 = vset.pattern.permute.xlu0 0
    %575 = vperm.xlu0 %574, %v573
    %v576 = vpop.permute.xlu0 %575
    %vm577 = vcmp.eq.s32.totalorder %v576, 1
    %v578 = vsel %vm577, %v570, %v354
    %v579 = vsel %vm577, %v568, %v355
    %s580 = scalar_lea.vmem [#allocation3], 32
    %v581 = vld [vmem:[%s580] sm:$0xff]
    %v582 = vld [vmem:[%s580 + $0x8] sm:$0xff]
    %v583 = vld [vmem:[%s580 + $0x10] sm:$0xff]
    %v584 = vld [vmem:[%s580 + $0x18] sm:$0xff]
    %585 = vmatpush.msra.mxu0 %v420
    %586 = vmatpush.msra.mxu0 %v416
    %587 = vmatpush.msra.mxu0 %v412
    %588 = vmatpush.msra.mxu0 %v408
    %589 = vmatpush.msra.mxu0 %v404
    %590 = vmatpush.msra.mxu0 %v400
    %591 = vmatpush.msra.mxu0 %v396
    %592 = vmatpush.msra.mxu0 %v392
    %593 = vmatpush.msra.mxu0 %v388
    %594 = vmatpush.msra.mxu0 %v384
    %595 = vmatpush.msra.mxu0 %v380
    %596 = vmatpush.msra.mxu0 %v376
    %597 = vmatpush.msra.mxu0 %v372
    %598 = vmatpush.msra.mxu0 %v368
    %599 = vmatpush.msra.mxu0 %v364
    %600 = vmatpush.msra.mxu0 %v360
    %601 = vmatmul.f32.gmra.mxu0 %v578
    %v602 = vpop.f32.mrf.mxu0
    %v603 = vadd.f32 0.0, %v602
    %604 = vdwg.mxu0
    %605 = vmatpush.msra.mxu0 %v421
    %606 = vmatpush.msra.mxu0 %v417
    %607 = vmatpush.msra.mxu0 %v413
    %608 = vmatpush.msra.mxu0 %v409
    %609 = vmatpush.msra.mxu0 %v405
    %610 = vmatpush.msra.mxu0 %v401
    %611 = vmatpush.msra.mxu0 %v397
    %612 = vmatpush.msra.mxu0 %v393
    %613 = vmatpush.msra.mxu0 %v389
    %614 = vmatpush.msra.mxu0 %v385
    %615 = vmatpush.msra.mxu0 %v381
    %616 = vmatpush.msra.mxu0 %v377
    %617 = vmatpush.msra.mxu0 %v373
    %618 = vmatpush.msra.mxu0 %v369
    %619 = vmatpush.msra.mxu0 %v365
    %620 = vmatpush.msra.mxu0 %v361
    %621 = vmatmul.f32.gmra.mxu0 %v578
    %v622 = vpop.f32.mrf.mxu0
    %v623 = vadd.f32 0.0, %v622
    %624 = vdwg.mxu0
    %625 = vmatpush.msra.mxu0 %v422
    %626 = vmatpush.msra.mxu0 %v418
    %627 = vmatpush.msra.mxu0 %v414
    %628 = vmatpush.msra.mxu0 %v410
    %629 = vmatpush.msra.mxu0 %v406
    %630 = vmatpush.msra.mxu0 %v402
    %631 = vmatpush.msra.mxu0 %v398
    %632 = vmatpush.msra.mxu0 %v394
    %633 = vmatpush.msra.mxu0 %v390
    %634 = vmatpush.msra.mxu0 %v386
    %635 = vmatpush.msra.mxu0 %v382
    %636 = vmatpush.msra.mxu0 %v378
    %637 = vmatpush.msra.mxu0 %v374
    %638 = vmatpush.msra.mxu0 %v370
    %639 = vmatpush.msra.mxu0 %v366
    %640 = vmatpush.msra.mxu0 %v362
    %641 = vmatmul.f32.gmra.mxu0 %v578
    %v642 = vpop.f32.mrf.mxu0
    %v643 = vadd.f32 0.0, %v642
    %644 = vdwg.mxu0
    %645 = vmatpush.msra.mxu0 %v423
    %646 = vmatpush.msra.mxu0 %v419
    %647 = vmatpush.msra.mxu0 %v415
    %648 = vmatpush.msra.mxu0 %v411
    %649 = vmatpush.msra.mxu0 %v407
    %650 = vmatpush.msra.mxu0 %v403
    %651 = vmatpush.msra.mxu0 %v399
    %652 = vmatpush.msra.mxu0 %v395
    %653 = vmatpush.msra.mxu0 %v391
    %654 = vmatpush.msra.mxu0 %v387
    %655 = vmatpush.msra.mxu0 %v383
    %656 = vmatpush.msra.mxu0 %v379
    %657 = vmatpush.msra.mxu0 %v375
    %658 = vmatpush.msra.mxu0 %v371
    %659 = vmatpush.msra.mxu0 %v367
    %660 = vmatpush.msra.mxu0 %v363
    %661 = vmatmul.f32.gmra.mxu0 %v578
    %v662 = vpop.f32.mrf.mxu0
    %v663 = vadd.f32 0.0, %v662
    %664 = vdwg.mxu0
    %v665 = vadd.f32 %v581, %v603
    %v666 = vadd.f32 %v582, %v623
    %v667 = vadd.f32 %v583, %v643
    %v668 = vadd.f32 %v584, %v663
    %v669 = vxor.u32 %v665, 2147483648
    %v670 = vmul.f32 %v669, 1.442695
    %v671 = vpow.pop %v670
    %v672 = vadd.f32 %v671, 1.0
    %v673 = vrcp.pop %v672
    %v674 = vmul.f32 %v672, %v673
    %v675 = vsub.f32 1.0, %v674
    %v676 = vmul.f32 %v673, %v675
    %v677 = vadd.f32 %v673, %v676
    %vm678 = vweird.f32 %v672
    %vm679 = vweird.f32 %v673
    %vm680 = vmor %vm678, %vm679
    %v681 = vsel %vm680, %v673, %v677
    %v682 = vand.u32 2147483647, %v672
    %vm683 = vcmp.eq.f32.partialorder %v682, 8.507059e+37
    %v684 = vand.u32 %v672, 2147483648
    %v685 = vor.u32 1.1754944e-38, %v684
    %v686 = vsel %vm683, %v685, %v681
    %v687 = vmul.f32 1.0, %v686
    %v688 = vxor.u32 %v666, 2147483648
    %v689 = vmul.f32 %v688, 1.442695
    %v690 = vpow.pop %v689
    %v691 = vadd.f32 %v690, 1.0
    %v692 = vrcp.pop %v691
    %v693 = vmul.f32 %v691, %v692
    %v694 = vsub.f32 1.0, %v693
    %v695 = vmul.f32 %v692, %v694
    %v696 = vadd.f32 %v692, %v695
    %vm697 = vweird.f32 %v691
    %vm698 = vweird.f32 %v692
    %vm699 = vmor %vm697, %vm698
    %v700 = vsel %vm699, %v692, %v696
    %v701 = vand.u32 2147483647, %v691
    %vm702 = vcmp.eq.f32.partialorder %v701, 8.507059e+37
    %v703 = vand.u32 %v691, 2147483648
    %v704 = vor.u32 1.1754944e-38, %v703
    %v705 = vsel %vm702, %v704, %v700
    %v706 = vmul.f32 1.0, %v705
    %v707 = vtanh.pop %v667
    %v708 = vxor.u32 %v668, 2147483648
    %v709 = vmul.f32 %v708, 1.442695
    %v710 = vpow.pop %v709
    %v711 = vadd.f32 %v710, 1.0
    %v712 = vrcp.pop %v711
    %v713 = vmul.f32 %v711, %v712
    %v714 = vsub.f32 1.0, %v713
    %v715 = vmul.f32 %v712, %v714
    %v716 = vadd.f32 %v712, %v715
    %vm717 = vweird.f32 %v711
    %vm718 = vweird.f32 %v712
    %vm719 = vmor %vm717, %vm718
    %v720 = vsel %vm719, %v712, %v716
    %v721 = vand.u32 2147483647, %v711
    %vm722 = vcmp.eq.f32.partialorder %v721, 8.507059e+37
    %v723 = vand.u32 %v711, 2147483648
    %v724 = vor.u32 1.1754944e-38, %v723
    %v725 = vsel %vm722, %v724, %v720
    %v726 = vmul.f32 1.0, %v725
    %v727 = vmul.f32 %v706, %v579
    %v728 = vmul.f32 %v687, %v707
    %v729 = vadd.f32 %v727, %v728
    %v730 = vtanh.pop %v729
    %v731 = vmul.f32 %v726, %v730
    %s732 = sadd.s32 %s353, 1
    %v733 = vstv %s732
    %vm734 = vcmp.gt.s32.totalorder %v352, %v733
    %v735 = vsel %vm734, 1, 0
    %736 = vset.pattern.permute.xlu0 0
    %737 = vperm.xlu0 %736, %v735
    %v738 = vpop.permute.xlu0 %737
    %vm739 = vcmp.eq.s32.totalorder %v738, 1
    %v740 = vsel %vm739, %v731, %v578
    %v741 = vsel %vm739, %v729, %v579
    %s742 = scalar_lea.vmem [#allocation3], 64
    %v743 = vld [vmem:[%s742] sm:$0xff]
    %v744 = vld [vmem:[%s742 + $0x8] sm:$0xff]
    %v745 = vld [vmem:[%s742 + $0x10] sm:$0xff]
    %v746 = vld [vmem:[%s742 + $0x18] sm:$0xff]
    %747 = vmatpush.msra.mxu0 %v420
    %748 = vmatpush.msra.mxu0 %v416
    %749 = vmatpush.msra.mxu0 %v412
    %750 = vmatpush.msra.mxu0 %v408
    %751 = vmatpush.msra.mxu0 %v404
    %752 = vmatpush.msra.mxu0 %v400
    %753 = vmatpush.msra.mxu0 %v396
    %754 = vmatpush.msra.mxu0 %v392
    %755 = vmatpush.msra.mxu0 %v388
    %756 = vmatpush.msra.mxu0 %v384
    %757 = vmatpush.msra.mxu0 %v380
    %758 = vmatpush.msra.mxu0 %v376
    %759 = vmatpush.msra.mxu0 %v372
    %760 = vmatpush.msra.mxu0 %v368
    %761 = vmatpush.msra.mxu0 %v364
    %762 = vmatpush.msra.mxu0 %v360
    %763 = vmatmul.f32.gmra.mxu0 %v740
    %v764 = vpop.f32.mrf.mxu0
    %v765 = vadd.f32 0.0, %v764
    %766 = vdwg.mxu0
    %767 = vmatpush.msra.mxu0 %v421
    %768 = vmatpush.msra.mxu0 %v417
    %769 = vmatpush.msra.mxu0 %v413
    %770 = vmatpush.msra.mxu0 %v409
    %771 = vmatpush.msra.mxu0 %v405
    %772 = vmatpush.msra.mxu0 %v401
    %773 = vmatpush.msra.mxu0 %v397
    %774 = vmatpush.msra.mxu0 %v393
    %775 = vmatpush.msra.mxu0 %v389
    %776 = vmatpush.msra.mxu0 %v385
    %777 = vmatpush.msra.mxu0 %v381
    %778 = vmatpush.msra.mxu0 %v377
    %779 = vmatpush.msra.mxu0 %v373
    %780 = vmatpush.msra.mxu0 %v369
    %781 = vmatpush.msra.mxu0 %v365
    %782 = vmatpush.msra.mxu0 %v361
    %783 = vmatmul.f32.gmra.mxu0 %v740
    %v784 = vpop.f32.mrf.mxu0
    %v785 = vadd.f32 0.0, %v784
    %786 = vdwg.mxu0
    %787 = vmatpush.msra.mxu0 %v422
    %788 = vmatpush.msra.mxu0 %v418
    %789 = vmatpush.msra.mxu0 %v414
    %790 = vmatpush.msra.mxu0 %v410
    %791 = vmatpush.msra.mxu0 %v406
    %792 = vmatpush.msra.mxu0 %v402
    %793 = vmatpush.msra.mxu0 %v398
    %794 = vmatpush.msra.mxu0 %v394
    %795 = vmatpush.msra.mxu0 %v390
    %796 = vmatpush.msra.mxu0 %v386
    %797 = vmatpush.msra.mxu0 %v382
    %798 = vmatpush.msra.mxu0 %v378
    %799 = vmatpush.msra.mxu0 %v374
    %800 = vmatpush.msra.mxu0 %v370
    %801 = vmatpush.msra.mxu0 %v366
    %802 = vmatpush.msra.mxu0 %v362
    %803 = vmatmul.f32.gmra.mxu0 %v740
    %v804 = vpop.f32.mrf.mxu0
    %v805 = vadd.f32 0.0, %v804
    %806 = vdwg.mxu0
    %807 = vmatpush.msra.mxu0 %v423
    %808 = vmatpush.msra.mxu0 %v419
    %809 = vmatpush.msra.mxu0 %v415
    %810 = vmatpush.msra.mxu0 %v411
    %811 = vmatpush.msra.mxu0 %v407
    %812 = vmatpush.msra.mxu0 %v403
    %813 = vmatpush.msra.mxu0 %v399
    %814 = vmatpush.msra.mxu0 %v395
    %815 = vmatpush.msra.mxu0 %v391
    %816 = vmatpush.msra.mxu0 %v387
    %817 = vmatpush.msra.mxu0 %v383
    %818 = vmatpush.msra.mxu0 %v379
    %819 = vmatpush.msra.mxu0 %v375
    %820 = vmatpush.msra.mxu0 %v371
    %821 = vmatpush.msra.mxu0 %v367
    %822 = vmatpush.msra.mxu0 %v363
    %823 = vmatmul.f32.gmra.mxu0 %v740
    %v824 = vpop.f32.mrf.mxu0
    %v825 = vadd.f32 0.0, %v824
    %826 = vdwg.mxu0
    %v827 = vadd.f32 %v743, %v765
    %v828 = vadd.f32 %v744, %v785
    %v829 = vadd.f32 %v745, %v805
    %v830 = vadd.f32 %v746, %v825
    %v831 = vxor.u32 %v827, 2147483648
    %v832 = vmul.f32 %v831, 1.442695
    %v833 = vpow.pop %v832
    %v834 = vadd.f32 %v833, 1.0
    %v835 = vrcp.pop %v834
    %v836 = vmul.f32 %v834, %v835
    %v837 = vsub.f32 1.0, %v836
    %v838 = vmul.f32 %v835, %v837
    %v839 = vadd.f32 %v835, %v838
    %vm840 = vweird.f32 %v834
    %vm841 = vweird.f32 %v835
    %vm842 = vmor %vm840, %vm841
    %v843 = vsel %vm842, %v835, %v839
    %v844 = vand.u32 2147483647, %v834
    %vm845 = vcmp.eq.f32.partialorder %v844, 8.507059e+37
    %v846 = vand.u32 %v834, 2147483648
    %v847 = vor.u32 1.1754944e-38, %v846
    %v848 = vsel %vm845, %v847, %v843
    %v849 = vmul.f32 1.0, %v848
    %v850 = vxor.u32 %v828, 2147483648
    %v851 = vmul.f32 %v850, 1.442695
    %v852 = vpow.pop %v851
    %v853 = vadd.f32 %v852, 1.0
    %v854 = vrcp.pop %v853
    %v855 = vmul.f32 %v853, %v854
    %v856 = vsub.f32 1.0, %v855
    %v857 = vmul.f32 %v854, %v856
    %v858 = vadd.f32 %v854, %v857
    %vm859 = vweird.f32 %v853
    %vm860 = vweird.f32 %v854
    %vm861 = vmor %vm859, %vm860
    %v862 = vsel %vm861, %v854, %v858
    %v863 = vand.u32 2147483647, %v853
    %vm864 = vcmp.eq.f32.partialorder %v863, 8.507059e+37
    %v865 = vand.u32 %v853, 2147483648
    %v866 = vor.u32 1.1754944e-38, %v865
    %v867 = vsel %vm864, %v866, %v862
    %v868 = vmul.f32 1.0, %v867
    %v869 = vtanh.pop %v829
    %v870 = vxor.u32 %v830, 2147483648
    %v871 = vmul.f32 %v870, 1.442695
    %v872 = vpow.pop %v871
    %v873 = vadd.f32 %v872, 1.0
    %v874 = vrcp.pop %v873
    %v875 = vmul.f32 %v873, %v874
    %v876 = vsub.f32 1.0, %v875
    %v877 = vmul.f32 %v874, %v876
    %v878 = vadd.f32 %v874, %v877
    %vm879 = vweird.f32 %v873
    %vm880 = vweird.f32 %v874
    %vm881 = vmor %vm879, %vm880
    %v882 = vsel %vm881, %v874, %v878
    %v883 = vand.u32 2147483647, %v873
    %vm884 = vcmp.eq.f32.partialorder %v883, 8.507059e+37
    %v885 = vand.u32 %v873, 2147483648
    %v886 = vor.u32 1.1754944e-38, %v885
    %v887 = vsel %vm884, %v886, %v882
    %v888 = vmul.f32 1.0, %v887
    %v889 = vmul.f32 %v868, %v741
    %v890 = vmul.f32 %v849, %v869
    %v891 = vadd.f32 %v889, %v890
    %v892 = vtanh.pop %v891
    %v893 = vmul.f32 %v888, %v892
    %s894 = sadd.s32 %s353, 2
    %v895 = vstv %s894
    %vm896 = vcmp.gt.s32.totalorder %v352, %v895
    %v897 = vsel %vm896, 1, 0
    %898 = vset.pattern.permute.xlu0 0
    %899 = vperm.xlu0 %898, %v897
    %v900 = vpop.permute.xlu0 %899
    %vm901 = vcmp.eq.s32.totalorder %v900, 1
    %v902 = vsel %vm901, %v893, %v740
    %v903 = vsel %vm901, %v891, %v741
    %s904 = scalar_lea.vmem [#allocation3], 96
    %v905 = vld [vmem:[%s904] sm:$0xff]
    %v906 = vld [vmem:[%s904 + $0x8] sm:$0xff]
    %v907 = vld [vmem:[%s904 + $0x10] sm:$0xff]
    %v908 = vld [vmem:[%s904 + $0x18] sm:$0xff]
    %909 = vmatpush.msra.mxu0 %v420
    %910 = vmatpush.msra.mxu0 %v416
    %911 = vmatpush.msra.mxu0 %v412
    %912 = vmatpush.msra.mxu0 %v408
    %913 = vmatpush.msra.mxu0 %v404
    %914 = vmatpush.msra.mxu0 %v400
    %915 = vmatpush.msra.mxu0 %v396
    %916 = vmatpush.msra.mxu0 %v392
    %917 = vmatpush.msra.mxu0 %v388
    %918 = vmatpush.msra.mxu0 %v384
    %919 = vmatpush.msra.mxu0 %v380
    %920 = vmatpush.msra.mxu0 %v376
    %921 = vmatpush.msra.mxu0 %v372
    %922 = vmatpush.msra.mxu0 %v368
    %923 = vmatpush.msra.mxu0 %v364
    %924 = vmatpush.msra.mxu0 %v360
    %925 = vmatmul.f32.gmra.mxu0 %v902
    %v926 = vpop.f32.mrf.mxu0
    %v927 = vadd.f32 0.0, %v926
    %928 = vdwg.mxu0
    %929 = vmatpush.msra.mxu0 %v421
    %930 = vmatpush.msra.mxu0 %v417
    %931 = vmatpush.msra.mxu0 %v413
    %932 = vmatpush.msra.mxu0 %v409
    %933 = vmatpush.msra.mxu0 %v405
    %934 = vmatpush.msra.mxu0 %v401
    %935 = vmatpush.msra.mxu0 %v397
    %936 = vmatpush.msra.mxu0 %v393
    %937 = vmatpush.msra.mxu0 %v389
    %938 = vmatpush.msra.mxu0 %v385
    %939 = vmatpush.msra.mxu0 %v381
    %940 = vmatpush.msra.mxu0 %v377
    %941 = vmatpush.msra.mxu0 %v373
    %942 = vmatpush.msra.mxu0 %v369
    %943 = vmatpush.msra.mxu0 %v365
    %944 = vmatpush.msra.mxu0 %v361
    %945 = vmatmul.f32.gmra.mxu0 %v902
    %v946 = vpop.f32.mrf.mxu0
    %v947 = vadd.f32 0.0, %v946
    %948 = vdwg.mxu0
    %949 = vmatpush.msra.mxu0 %v422
    %950 = vmatpush.msra.mxu0 %v418
    %951 = vmatpush.msra.mxu0 %v414
    %952 = vmatpush.msra.mxu0 %v410
    %953 = vmatpush.msra.mxu0 %v406
    %954 = vmatpush.msra.mxu0 %v402
    %955 = vmatpush.msra.mxu0 %v398
    %956 = vmatpush.msra.mxu0 %v394
    %957 = vmatpush.msra.mxu0 %v390
    %958 = vmatpush.msra.mxu0 %v386
    %959 = vmatpush.msra.mxu0 %v382
    %960 = vmatpush.msra.mxu0 %v378
    %961 = vmatpush.msra.mxu0 %v374
    %962 = vmatpush.msra.mxu0 %v370
    %963 = vmatpush.msra.mxu0 %v366
    %964 = vmatpush.msra.mxu0 %v362
    %965 = vmatmul.f32.gmra.mxu0 %v902
    %v966 = vpop.f32.mrf.mxu0
    %v967 = vadd.f32 0.0, %v966
    %968 = vdwg.mxu0
    %969 = vmatpush.msra.mxu0 %v423
    %970 = vmatpush.msra.mxu0 %v419
    %971 = vmatpush.msra.mxu0 %v415
    %972 = vmatpush.msra.mxu0 %v411
    %973 = vmatpush.msra.mxu0 %v407
    %974 = vmatpush.msra.mxu0 %v403
    %975 = vmatpush.msra.mxu0 %v399
    %976 = vmatpush.msra.mxu0 %v395
    %977 = vmatpush.msra.mxu0 %v391
    %978 = vmatpush.msra.mxu0 %v387
    %979 = vmatpush.msra.mxu0 %v383
    %980 = vmatpush.msra.mxu0 %v379
    %981 = vmatpush.msra.mxu0 %v375
    %982 = vmatpush.msra.mxu0 %v371
    %983 = vmatpush.msra.mxu0 %v367
    %984 = vmatpush.msra.mxu0 %v363
    %985 = vmatmul.f32.gmra.mxu0 %v902
    %v986 = vpop.f32.mrf.mxu0
    %v987 = vadd.f32 0.0, %v986
    %988 = vdwg.mxu0
    %v989 = vadd.f32 %v905, %v927
    %v990 = vadd.f32 %v906, %v947
    %v991 = vadd.f32 %v907, %v967
    %v992 = vadd.f32 %v908, %v987
    %v993 = vxor.u32 %v989, 2147483648
    %v994 = vmul.f32 %v993, 1.442695
    %v995 = vpow.pop %v994
    %v996 = vadd.f32 %v995, 1.0
    %v997 = vrcp.pop %v996
    %v998 = vmul.f32 %v996, %v997
    %v999 = vsub.f32 1.0, %v998
    %v1000 = vmul.f32 %v997, %v999
    %v1001 = vadd.f32 %v997, %v1000
    %vm1002 = vweird.f32 %v996
    %vm1003 = vweird.f32 %v997
    %vm1004 = vmor %vm1002, %vm1003
    %v1005 = vsel %vm1004, %v997, %v1001
    %v1006 = vand.u32 2147483647, %v996
    %vm1007 = vcmp.eq.f32.partialorder %v1006, 8.507059e+37
    %v1008 = vand.u32 %v996, 2147483648
    %v1009 = vor.u32 1.1754944e-38, %v1008
    %v1010 = vsel %vm1007, %v1009, %v1005
    %v1011 = vmul.f32 1.0, %v1010
    %v1012 = vxor.u32 %v990, 2147483648
    %v1013 = vmul.f32 %v1012, 1.442695
    %v1014 = vpow.pop %v1013
    %v1015 = vadd.f32 %v1014, 1.0
    %v1016 = vrcp.pop %v1015
    %v1017 = vmul.f32 %v1015, %v1016
    %v1018 = vsub.f32 1.0, %v1017
    %v1019 = vmul.f32 %v1016, %v1018
    %v1020 = vadd.f32 %v1016, %v1019
    %vm1021 = vweird.f32 %v1015
    %vm1022 = vweird.f32 %v1016
    %vm1023 = vmor %vm1021, %vm1022
    %v1024 = vsel %vm1023, %v1016, %v1020
    %v1025 = vand.u32 2147483647, %v1015
    %vm1026 = vcmp.eq.f32.partialorder %v1025, 8.507059e+37
    %v1027 = vand.u32 %v1015, 2147483648
    %v1028 = vor.u32 1.1754944e-38, %v1027
    %v1029 = vsel %vm1026, %v1028, %v1024
    %v1030 = vmul.f32 1.0, %v1029
    %v1031 = vtanh.pop %v991
    %v1032 = vxor.u32 %v992, 2147483648
    %v1033 = vmul.f32 %v1032, 1.442695
    %v1034 = vpow.pop %v1033
    %v1035 = vadd.f32 %v1034, 1.0
    %v1036 = vrcp.pop %v1035
    %v1037 = vmul.f32 %v1035, %v1036
    %v1038 = vsub.f32 1.0, %v1037
    %v1039 = vmul.f32 %v1036, %v1038
    %v1040 = vadd.f32 %v1036, %v1039
    %vm1041 = vweird.f32 %v1035
    %vm1042 = vweird.f32 %v1036
    %vm1043 = vmor %vm1041, %vm1042
    %v1044 = vsel %vm1043, %v1036, %v1040
    %v1045 = vand.u32 2147483647, %v1035
    %vm1046 = vcmp.eq.f32.partialorder %v1045, 8.507059e+37
    %v1047 = vand.u32 %v1035, 2147483648
    %v1048 = vor.u32 1.1754944e-38, %v1047
    %v1049 = vsel %vm1046, %v1048, %v1044
    %v1050 = vmul.f32 1.0, %v1049
    %v1051 = vmul.f32 %v1030, %v903
    %v1052 = vmul.f32 %v1011, %v1031
    %v1053 = vadd.f32 %v1051, %v1052
    %v1054 = vtanh.pop %v1053
    %v1055 = vmul.f32 %v1050, %v1054
    %s1056 = sadd.s32 %s353, 3
    %v1057 = vstv %s1056
    %vm1058 = vcmp.gt.s32.totalorder %v352, %v1057
    %v1059 = vsel %vm1058, 1, 0
    %1060 = vset.pattern.permute.xlu0 0
    %1061 = vperm.xlu0 %1060, %v1059
    %v1062 = vpop.permute.xlu0 %1061
    %vm1063 = vcmp.eq.s32.totalorder %v1062, 1
    %v1064 = vsel %vm1063, %v1055, %v902
    %v1065 = vsel %vm1063, %v1053, %v903
    %s1066 = scalar_lea.vmem [#allocation3], 128
    %v1067 = vld [vmem:[%s1066] sm:$0xff]
    %v1068 = vld [vmem:[%s1066 + $0x8] sm:$0xff]
    %v1069 = vld [vmem:[%s1066 + $0x10] sm:$0xff]
    %v1070 = vld [vmem:[%s1066 + $0x18] sm:$0xff]
    %1071 = vmatpush.msra.mxu0 %v420
    %1072 = vmatpush.msra.mxu0 %v416
    %1073 = vmatpush.msra.mxu0 %v412
    %1074 = vmatpush.msra.mxu0 %v408
    %1075 = vmatpush.msra.mxu0 %v404
    %1076 = vmatpush.msra.mxu0 %v400
    %1077 = vmatpush.msra.mxu0 %v396
    %1078 = vmatpush.msra.mxu0 %v392
    %1079 = vmatpush.msra.mxu0 %v388
    %1080 = vmatpush.msra.mxu0 %v384
    %1081 = vmatpush.msra.mxu0 %v380
    %1082 = vmatpush.msra.mxu0 %v376
    %1083 = vmatpush.msra.mxu0 %v372
    %1084 = vmatpush.msra.mxu0 %v368
    %1085 = vmatpush.msra.mxu0 %v364
    %1086 = vmatpush.msra.mxu0 %v360
    %1087 = vmatmul.f32.gmra.mxu0 %v1064
    %v1088 = vpop.f32.mrf.mxu0
    %v1089 = vadd.f32 0.0, %v1088
    %1090 = vdwg.mxu0
    %1091 = vmatpush.msra.mxu0 %v421
    %1092 = vmatpush.msra.mxu0 %v417
    %1093 = vmatpush.msra.mxu0 %v413
    %1094 = vmatpush.msra.mxu0 %v409
    %1095 = vmatpush.msra.mxu0 %v405
    %1096 = vmatpush.msra.mxu0 %v401
    %1097 = vmatpush.msra.mxu0 %v397
    %1098 = vmatpush.msra.mxu0 %v393
    %1099 = vmatpush.msra.mxu0 %v389
    %1100 = vmatpush.msra.mxu0 %v385
    %1101 = vmatpush.msra.mxu0 %v381
    %1102 = vmatpush.msra.mxu0 %v377
    %1103 = vmatpush.msra.mxu0 %v373
    %1104 = vmatpush.msra.mxu0 %v369
    %1105 = vmatpush.msra.mxu0 %v365
    %1106 = vmatpush.msra.mxu0 %v361
    %1107 = vmatmul.f32.gmra.mxu0 %v1064
    %v1108 = vpop.f32.mrf.mxu0
    %v1109 = vadd.f32 0.0, %v1108
    %1110 = vdwg.mxu0
    %1111 = vmatpush.msra.mxu0 %v422
    %1112 = vmatpush.msra.mxu0 %v418
    %1113 = vmatpush.msra.mxu0 %v414
    %1114 = vmatpush.msra.mxu0 %v410
    %1115 = vmatpush.msra.mxu0 %v406
    %1116 = vmatpush.msra.mxu0 %v402
    %1117 = vmatpush.msra.mxu0 %v398
    %1118 = vmatpush.msra.mxu0 %v394
    %1119 = vmatpush.msra.mxu0 %v390
    %1120 = vmatpush.msra.mxu0 %v386
    %1121 = vmatpush.msra.mxu0 %v382
    %1122 = vmatpush.msra.mxu0 %v378
    %1123 = vmatpush.msra.mxu0 %v374
    %1124 = vmatpush.msra.mxu0 %v370
    %1125 = vmatpush.msra.mxu0 %v366
    %1126 = vmatpush.msra.mxu0 %v362
    %1127 = vmatmul.f32.gmra.mxu0 %v1064
    %v1128 = vpop.f32.mrf.mxu0
    %v1129 = vadd.f32 0.0, %v1128
    %1130 = vdwg.mxu0
    %1131 = vmatpush.msra.mxu0 %v423
    %1132 = vmatpush.msra.mxu0 %v419
    %1133 = vmatpush.msra.mxu0 %v415
    %1134 = vmatpush.msra.mxu0 %v411
    %1135 = vmatpush.msra.mxu0 %v407
    %1136 = vmatpush.msra.mxu0 %v403
    %1137 = vmatpush.msra.mxu0 %v399
    %1138 = vmatpush.msra.mxu0 %v395
    %1139 = vmatpush.msra.mxu0 %v391
    %1140 = vmatpush.msra.mxu0 %v387
    %1141 = vmatpush.msra.mxu0 %v383
    %1142 = vmatpush.msra.mxu0 %v379
    %1143 = vmatpush.msra.mxu0 %v375
    %1144 = vmatpush.msra.mxu0 %v371
    %1145 = vmatpush.msra.mxu0 %v367
    %1146 = vmatpush.msra.mxu0 %v363
    %1147 = vmatmul.f32.gmra.mxu0 %v1064
    %v1148 = vpop.f32.mrf.mxu0
    %v1149 = vadd.f32 0.0, %v1148
    %1150 = vdwg.mxu0
    %v1151 = vadd.f32 %v1067, %v1089
    %v1152 = vadd.f32 %v1068, %v1109
    %v1153 = vadd.f32 %v1069, %v1129
    %v1154 = vadd.f32 %v1070, %v1149
    %v1155 = vxor.u32 %v1151, 2147483648
    %v1156 = vmul.f32 %v1155, 1.442695
    %v1157 = vpow.pop %v1156
    %v1158 = vadd.f32 %v1157, 1.0
    %v1159 = vrcp.pop %v1158
    %v1160 = vmul.f32 %v1158, %v1159
    %v1161 = vsub.f32 1.0, %v1160
    %v1162 = vmul.f32 %v1159, %v1161
    %v1163 = vadd.f32 %v1159, %v1162
    %vm1164 = vweird.f32 %v1158
    %vm1165 = vweird.f32 %v1159
    %vm1166 = vmor %vm1164, %vm1165
    %v1167 = vsel %vm1166, %v1159, %v1163
    %v1168 = vand.u32 2147483647, %v1158
    %vm1169 = vcmp.eq.f32.partialorder %v1168, 8.507059e+37
    %v1170 = vand.u32 %v1158, 2147483648
    %v1171 = vor.u32 1.1754944e-38, %v1170
    %v1172 = vsel %vm1169, %v1171, %v1167
    %v1173 = vmul.f32 1.0, %v1172
    %v1174 = vxor.u32 %v1152, 2147483648
    %v1175 = vmul.f32 %v1174, 1.442695
    %v1176 = vpow.pop %v1175
    %v1177 = vadd.f32 %v1176, 1.0
    %v1178 = vrcp.pop %v1177
    %v1179 = vmul.f32 %v1177, %v1178
    %v1180 = vsub.f32 1.0, %v1179
    %v1181 = vmul.f32 %v1178, %v1180
    %v1182 = vadd.f32 %v1178, %v1181
    %vm1183 = vweird.f32 %v1177
    %vm1184 = vweird.f32 %v1178
    %vm1185 = vmor %vm1183, %vm1184
    %v1186 = vsel %vm1185, %v1178, %v1182
    %v1187 = vand.u32 2147483647, %v1177
    %vm1188 = vcmp.eq.f32.partialorder %v1187, 8.507059e+37
    %v1189 = vand.u32 %v1177, 2147483648
    %v1190 = vor.u32 1.1754944e-38, %v1189
    %v1191 = vsel %vm1188, %v1190, %v1186
    %v1192 = vmul.f32 1.0, %v1191
    %v1193 = vtanh.pop %v1153
    %v1194 = vxor.u32 %v1154, 2147483648
    %v1195 = vmul.f32 %v1194, 1.442695
    %v1196 = vpow.pop %v1195
    %v1197 = vadd.f32 %v1196, 1.0
    %v1198 = vrcp.pop %v1197
    %v1199 = vmul.f32 %v1197, %v1198
    %v1200 = vsub.f32 1.0, %v1199
    %v1201 = vmul.f32 %v1198, %v1200
    %v1202 = vadd.f32 %v1198, %v1201
    %vm1203 = vweird.f32 %v1197
    %vm1204 = vweird.f32 %v1198
    %vm1205 = vmor %vm1203, %vm1204
    %v1206 = vsel %vm1205, %v1198, %v1202
    %v1207 = vand.u32 2147483647, %v1197
    %vm1208 = vcmp.eq.f32.partialorder %v1207, 8.507059e+37
    %v1209 = vand.u32 %v1197, 2147483648
    %v1210 = vor.u32 1.1754944e-38, %v1209
    %v1211 = vsel %vm1208, %v1210, %v1206
    %v1212 = vmul.f32 1.0, %v1211
    %v1213 = vmul.f32 %v1192, %v1065
    %v1214 = vmul.f32 %v1173, %v1193
    %v1215 = vadd.f32 %v1213, %v1214
    %v1216 = vtanh.pop %v1215
    %v1217 = vmul.f32 %v1212, %v1216
    %s1218 = sadd.s32 %s353, 4
    %v1219 = vstv %s1218
    %vm1220 = vcmp.gt.s32.totalorder %v352, %v1219
    %v1221 = vsel %vm1220, 1, 0
    %1222 = vset.pattern.permute.xlu0 0
    %1223 = vperm.xlu0 %1222, %v1221
    %v1224 = vpop.permute.xlu0 %1223
    %vm1225 = vcmp.eq.s32.totalorder %v1224, 1
    %v1226 = vsel %vm1225, %v1217, %v1064
    %v1227 = vsel %vm1225, %v1215, %v1065
    %s1228 = scalar_lea.vmem [#allocation3], 160
    %v1229 = vld [vmem:[%s1228] sm:$0xff]
    %v1230 = vld [vmem:[%s1228 + $0x8] sm:$0xff]
    %v1231 = vld [vmem:[%s1228 + $0x10] sm:$0xff]
    %v1232 = vld [vmem:[%s1228 + $0x18] sm:$0xff]
    %1233 = vmatpush.msra.mxu0 %v420
    %1234 = vmatpush.msra.mxu0 %v416
    %1235 = vmatpush.msra.mxu0 %v412
    %1236 = vmatpush.msra.mxu0 %v408
    %1237 = vmatpush.msra.mxu0 %v404
    %1238 = vmatpush.msra.mxu0 %v400
    %1239 = vmatpush.msra.mxu0 %v396
    %1240 = vmatpush.msra.mxu0 %v392
    %1241 = vmatpush.msra.mxu0 %v388
    %1242 = vmatpush.msra.mxu0 %v384
    %1243 = vmatpush.msra.mxu0 %v380
    %1244 = vmatpush.msra.mxu0 %v376
    %1245 = vmatpush.msra.mxu0 %v372
    %1246 = vmatpush.msra.mxu0 %v368
    %1247 = vmatpush.msra.mxu0 %v364
    %1248 = vmatpush.msra.mxu0 %v360
    %1249 = vmatmul.f32.gmra.mxu0 %v1226
    %v1250 = vpop.f32.mrf.mxu0
    %v1251 = vadd.f32 0.0, %v1250
    %1252 = vdwg.mxu0
    %1253 = vmatpush.msra.mxu0 %v421
    %1254 = vmatpush.msra.mxu0 %v417
    %1255 = vmatpush.msra.mxu0 %v413
    %1256 = vmatpush.msra.mxu0 %v409
    %1257 = vmatpush.msra.mxu0 %v405
    %1258 = vmatpush.msra.mxu0 %v401
    %1259 = vmatpush.msra.mxu0 %v397
    %1260 = vmatpush.msra.mxu0 %v393
    %1261 = vmatpush.msra.mxu0 %v389
    %1262 = vmatpush.msra.mxu0 %v385
    %1263 = vmatpush.msra.mxu0 %v381
    %1264 = vmatpush.msra.mxu0 %v377
    %1265 = vmatpush.msra.mxu0 %v373
    %1266 = vmatpush.msra.mxu0 %v369
    %1267 = vmatpush.msra.mxu0 %v365
    %1268 = vmatpush.msra.mxu0 %v361
    %1269 = vmatmul.f32.gmra.mxu0 %v1226
    %v1270 = vpop.f32.mrf.mxu0
    %v1271 = vadd.f32 0.0, %v1270
    %1272 = vdwg.mxu0
    %1273 = vmatpush.msra.mxu0 %v422
    %1274 = vmatpush.msra.mxu0 %v418
    %1275 = vmatpush.msra.mxu0 %v414
    %1276 = vmatpush.msra.mxu0 %v410
    %1277 = vmatpush.msra.mxu0 %v406
    %1278 = vmatpush.msra.mxu0 %v402
    %1279 = vmatpush.msra.mxu0 %v398
    %1280 = vmatpush.msra.mxu0 %v394
    %1281 = vmatpush.msra.mxu0 %v390
    %1282 = vmatpush.msra.mxu0 %v386
    %1283 = vmatpush.msra.mxu0 %v382
    %1284 = vmatpush.msra.mxu0 %v378
    %1285 = vmatpush.msra.mxu0 %v374
    %1286 = vmatpush.msra.mxu0 %v370
    %1287 = vmatpush.msra.mxu0 %v366
    %1288 = vmatpush.msra.mxu0 %v362
    %1289 = vmatmul.f32.gmra.mxu0 %v1226
    %v1290 = vpop.f32.mrf.mxu0
    %v1291 = vadd.f32 0.0, %v1290
    %1292 = vdwg.mxu0
    %1293 = vmatpush.msra.mxu0 %v423
    %1294 = vmatpush.msra.mxu0 %v419
    %1295 = vmatpush.msra.mxu0 %v415
    %1296 = vmatpush.msra.mxu0 %v411
    %1297 = vmatpush.msra.mxu0 %v407
    %1298 = vmatpush.msra.mxu0 %v403
    %1299 = vmatpush.msra.mxu0 %v399
    %1300 = vmatpush.msra.mxu0 %v395
    %1301 = vmatpush.msra.mxu0 %v391
    %1302 = vmatpush.msra.mxu0 %v387
    %1303 = vmatpush.msra.mxu0 %v383
    %1304 = vmatpush.msra.mxu0 %v379
    %1305 = vmatpush.msra.mxu0 %v375
    %1306 = vmatpush.msra.mxu0 %v371
    %1307 = vmatpush.msra.mxu0 %v367
    %1308 = vmatpush.msra.mxu0 %v363
    %1309 = vmatmul.f32.gmra.mxu0 %v1226
    %v1310 = vpop.f32.mrf.mxu0
    %v1311 = vadd.f32 0.0, %v1310
    %1312 = vdwg.mxu0
    %v1313 = vadd.f32 %v1229, %v1251
    %v1314 = vadd.f32 %v1230, %v1271
    %v1315 = vadd.f32 %v1231, %v1291
    %v1316 = vadd.f32 %v1232, %v1311
    %v1317 = vxor.u32 %v1313, 2147483648
    %v1318 = vmul.f32 %v1317, 1.442695
    %v1319 = vpow.pop %v1318
    %v1320 = vadd.f32 %v1319, 1.0
    %v1321 = vrcp.pop %v1320
    %v1322 = vmul.f32 %v1320, %v1321
    %v1323 = vsub.f32 1.0, %v1322
    %v1324 = vmul.f32 %v1321, %v1323
    %v1325 = vadd.f32 %v1321, %v1324
    %vm1326 = vweird.f32 %v1320
    %vm1327 = vweird.f32 %v1321
    %vm1328 = vmor %vm1326, %vm1327
    %v1329 = vsel %vm1328, %v1321, %v1325
    %v1330 = vand.u32 2147483647, %v1320
    %vm1331 = vcmp.eq.f32.partialorder %v1330, 8.507059e+37
    %v1332 = vand.u32 %v1320, 2147483648
    %v1333 = vor.u32 1.1754944e-38, %v1332
    %v1334 = vsel %vm1331, %v1333, %v1329
    %v1335 = vmul.f32 1.0, %v1334
    %v1336 = vxor.u32 %v1314, 2147483648
    %v1337 = vmul.f32 %v1336, 1.442695
    %v1338 = vpow.pop %v1337
    %v1339 = vadd.f32 %v1338, 1.0
    %v1340 = vrcp.pop %v1339
    %v1341 = vmul.f32 %v1339, %v1340
    %v1342 = vsub.f32 1.0, %v1341
    %v1343 = vmul.f32 %v1340, %v1342
    %v1344 = vadd.f32 %v1340, %v1343
    %vm1345 = vweird.f32 %v1339
    %vm1346 = vweird.f32 %v1340
    %vm1347 = vmor %vm1345, %vm1346
    %v1348 = vsel %vm1347, %v1340, %v1344
    %v1349 = vand.u32 2147483647, %v1339
    %vm1350 = vcmp.eq.f32.partialorder %v1349, 8.507059e+37
    %v1351 = vand.u32 %v1339, 2147483648
    %v1352 = vor.u32 1.1754944e-38, %v1351
    %v1353 = vsel %vm1350, %v1352, %v1348
    %v1354 = vmul.f32 1.0, %v1353
    %v1355 = vtanh.pop %v1315
    %v1356 = vxor.u32 %v1316, 2147483648
    %v1357 = vmul.f32 %v1356, 1.442695
    %v1358 = vpow.pop %v1357
    %v1359 = vadd.f32 %v1358, 1.0
    %v1360 = vrcp.pop %v1359
    %v1361 = vmul.f32 %v1359, %v1360
    %v1362 = vsub.f32 1.0, %v1361
    %v1363 = vmul.f32 %v1360, %v1362
    %v1364 = vadd.f32 %v1360, %v1363
    %vm1365 = vweird.f32 %v1359
    %vm1366 = vweird.f32 %v1360
    %vm1367 = vmor %vm1365, %vm1366
    %v1368 = vsel %vm1367, %v1360, %v1364
    %v1369 = vand.u32 2147483647, %v1359
    %vm1370 = vcmp.eq.f32.partialorder %v1369, 8.507059e+37
    %v1371 = vand.u32 %v1359, 2147483648
    %v1372 = vor.u32 1.1754944e-38, %v1371
    %v1373 = vsel %vm1370, %v1372, %v1368
    %v1374 = vmul.f32 1.0, %v1373
    %v1375 = vmul.f32 %v1354, %v1227
    %v1376 = vmul.f32 %v1335, %v1355
    %v1377 = vadd.f32 %v1375, %v1376
    %v1378 = vtanh.pop %v1377
    %v1379 = vmul.f32 %v1374, %v1378
    %s1380 = sadd.s32 %s353, 5
    %v1381 = vstv %s1380
    %vm1382 = vcmp.gt.s32.totalorder %v352, %v1381
    %v1383 = vsel %vm1382, 1, 0
    %1384 = vset.pattern.permute.xlu0 0
    %1385 = vperm.xlu0 %1384, %v1383
    %v1386 = vpop.permute.xlu0 %1385
    %vm1387 = vcmp.eq.s32.totalorder %v1386, 1
    %v1388 = vsel %vm1387, %v1379, %v1226
    %v1389 = vsel %vm1387, %v1377, %v1227
    %s1390 = scalar_lea.vmem [#allocation3], 192
    %v1391 = vld [vmem:[%s1390] sm:$0xff]
    %v1392 = vld [vmem:[%s1390 + $0x8] sm:$0xff]
    %v1393 = vld [vmem:[%s1390 + $0x10] sm:$0xff]
    %v1394 = vld [vmem:[%s1390 + $0x18] sm:$0xff]
    %1395 = vmatpush.msra.mxu0 %v420
    %1396 = vmatpush.msra.mxu0 %v416
    %1397 = vmatpush.msra.mxu0 %v412
    %1398 = vmatpush.msra.mxu0 %v408
    %1399 = vmatpush.msra.mxu0 %v404
    %1400 = vmatpush.msra.mxu0 %v400
    %1401 = vmatpush.msra.mxu0 %v396
    %1402 = vmatpush.msra.mxu0 %v392
    %1403 = vmatpush.msra.mxu0 %v388
    %1404 = vmatpush.msra.mxu0 %v384
    %1405 = vmatpush.msra.mxu0 %v380
    %1406 = vmatpush.msra.mxu0 %v376
    %1407 = vmatpush.msra.mxu0 %v372
    %1408 = vmatpush.msra.mxu0 %v368
    %1409 = vmatpush.msra.mxu0 %v364
    %1410 = vmatpush.msra.mxu0 %v360
    %1411 = vmatmul.f32.gmra.mxu0 %v1388
    %v1412 = vpop.f32.mrf.mxu0
    %v1413 = vadd.f32 0.0, %v1412
    %1414 = vdwg.mxu0
    %1415 = vmatpush.msra.mxu0 %v421
    %1416 = vmatpush.msra.mxu0 %v417
    %1417 = vmatpush.msra.mxu0 %v413
    %1418 = vmatpush.msra.mxu0 %v409
    %1419 = vmatpush.msra.mxu0 %v405
    %1420 = vmatpush.msra.mxu0 %v401
    %1421 = vmatpush.msra.mxu0 %v397
    %1422 = vmatpush.msra.mxu0 %v393
    %1423 = vmatpush.msra.mxu0 %v389
    %1424 = vmatpush.msra.mxu0 %v385
    %1425 = vmatpush.msra.mxu0 %v381
    %1426 = vmatpush.msra.mxu0 %v377
    %1427 = vmatpush.msra.mxu0 %v373
    %1428 = vmatpush.msra.mxu0 %v369
    %1429 = vmatpush.msra.mxu0 %v365
    %1430 = vmatpush.msra.mxu0 %v361
    %1431 = vmatmul.f32.gmra.mxu0 %v1388
    %v1432 = vpop.f32.mrf.mxu0
    %v1433 = vadd.f32 0.0, %v1432
    %1434 = vdwg.mxu0
    %1435 = vmatpush.msra.mxu0 %v422
    %1436 = vmatpush.msra.mxu0 %v418
    %1437 = vmatpush.msra.mxu0 %v414
    %1438 = vmatpush.msra.mxu0 %v410
    %1439 = vmatpush.msra.mxu0 %v406
    %1440 = vmatpush.msra.mxu0 %v402
    %1441 = vmatpush.msra.mxu0 %v398
    %1442 = vmatpush.msra.mxu0 %v394
    %1443 = vmatpush.msra.mxu0 %v390
    %1444 = vmatpush.msra.mxu0 %v386
    %1445 = vmatpush.msra.mxu0 %v382
    %1446 = vmatpush.msra.mxu0 %v378
    %1447 = vmatpush.msra.mxu0 %v374
    %1448 = vmatpush.msra.mxu0 %v370
    %1449 = vmatpush.msra.mxu0 %v366
    %1450 = vmatpush.msra.mxu0 %v362
    %1451 = vmatmul.f32.gmra.mxu0 %v1388
    %v1452 = vpop.f32.mrf.mxu0
    %v1453 = vadd.f32 0.0, %v1452
    %1454 = vdwg.mxu0
    %1455 = vmatpush.msra.mxu0 %v423
    %1456 = vmatpush.msra.mxu0 %v419
    %1457 = vmatpush.msra.mxu0 %v415
    %1458 = vmatpush.msra.mxu0 %v411
    %1459 = vmatpush.msra.mxu0 %v407
    %1460 = vmatpush.msra.mxu0 %v403
    %1461 = vmatpush.msra.mxu0 %v399
    %1462 = vmatpush.msra.mxu0 %v395
    %1463 = vmatpush.msra.mxu0 %v391
    %1464 = vmatpush.msra.mxu0 %v387
    %1465 = vmatpush.msra.mxu0 %v383
    %1466 = vmatpush.msra.mxu0 %v379
    %1467 = vmatpush.msra.mxu0 %v375
    %1468 = vmatpush.msra.mxu0 %v371
    %1469 = vmatpush.msra.mxu0 %v367
    %1470 = vmatpush.msra.mxu0 %v363
    %1471 = vmatmul.f32.gmra.mxu0 %v1388
    %v1472 = vpop.f32.mrf.mxu0
    %v1473 = vadd.f32 0.0, %v1472
    %1474 = vdwg.mxu0
    %v1475 = vadd.f32 %v1391, %v1413
    %v1476 = vadd.f32 %v1392, %v1433
    %v1477 = vadd.f32 %v1393, %v1453
    %v1478 = vadd.f32 %v1394, %v1473
    %v1479 = vxor.u32 %v1475, 2147483648
    %v1480 = vmul.f32 %v1479, 1.442695
    %v1481 = vpow.pop %v1480
    %v1482 = vadd.f32 %v1481, 1.0
    %v1483 = vrcp.pop %v1482
    %v1484 = vmul.f32 %v1482, %v1483
    %v1485 = vsub.f32 1.0, %v1484
    %v1486 = vmul.f32 %v1483, %v1485
    %v1487 = vadd.f32 %v1483, %v1486
    %vm1488 = vweird.f32 %v1482
    %vm1489 = vweird.f32 %v1483
    %vm1490 = vmor %vm1488, %vm1489
    %v1491 = vsel %vm1490, %v1483, %v1487
    %v1492 = vand.u32 2147483647, %v1482
    %vm1493 = vcmp.eq.f32.partialorder %v1492, 8.507059e+37
    %v1494 = vand.u32 %v1482, 2147483648
    %v1495 = vor.u32 1.1754944e-38, %v1494
    %v1496 = vsel %vm1493, %v1495, %v1491
    %v1497 = vmul.f32 1.0, %v1496
    %v1498 = vxor.u32 %v1476, 2147483648
    %v1499 = vmul.f32 %v1498, 1.442695
    %v1500 = vpow.pop %v1499
    %v1501 = vadd.f32 %v1500, 1.0
    %v1502 = vrcp.pop %v1501
    %v1503 = vmul.f32 %v1501, %v1502
    %v1504 = vsub.f32 1.0, %v1503
    %v1505 = vmul.f32 %v1502, %v1504
    %v1506 = vadd.f32 %v1502, %v1505
    %vm1507 = vweird.f32 %v1501
    %vm1508 = vweird.f32 %v1502
    %vm1509 = vmor %vm1507, %vm1508
    %v1510 = vsel %vm1509, %v1502, %v1506
    %v1511 = vand.u32 2147483647, %v1501
    %vm1512 = vcmp.eq.f32.partialorder %v1511, 8.507059e+37
    %v1513 = vand.u32 %v1501, 2147483648
    %v1514 = vor.u32 1.1754944e-38, %v1513
    %v1515 = vsel %vm1512, %v1514, %v1510
    %v1516 = vmul.f32 1.0, %v1515
    %v1517 = vtanh.pop %v1477
    %v1518 = vxor.u32 %v1478, 2147483648
    %v1519 = vmul.f32 %v1518, 1.442695
    %v1520 = vpow.pop %v1519
    %v1521 = vadd.f32 %v1520, 1.0
    %v1522 = vrcp.pop %v1521
    %v1523 = vmul.f32 %v1521, %v1522
    %v1524 = vsub.f32 1.0, %v1523
    %v1525 = vmul.f32 %v1522, %v1524
    %v1526 = vadd.f32 %v1522, %v1525
    %vm1527 = vweird.f32 %v1521
    %vm1528 = vweird.f32 %v1522
    %vm1529 = vmor %vm1527, %vm1528
    %v1530 = vsel %vm1529, %v1522, %v1526
    %v1531 = vand.u32 2147483647, %v1521
    %vm1532 = vcmp.eq.f32.partialorder %v1531, 8.507059e+37
    %v1533 = vand.u32 %v1521, 2147483648
    %v1534 = vor.u32 1.1754944e-38, %v1533
    %v1535 = vsel %vm1532, %v1534, %v1530
    %v1536 = vmul.f32 1.0, %v1535
    %v1537 = vmul.f32 %v1516, %v1389
    %v1538 = vmul.f32 %v1497, %v1517
    %v1539 = vadd.f32 %v1537, %v1538
    %v1540 = vtanh.pop %v1539
    %v1541 = vmul.f32 %v1536, %v1540
    %s1542 = sadd.s32 %s353, 6
    %v1543 = vstv %s1542
    %vm1544 = vcmp.gt.s32.totalorder %v352, %v1543
    %v1545 = vsel %vm1544, 1, 0
    %1546 = vset.pattern.permute.xlu0 0
    %1547 = vperm.xlu0 %1546, %v1545
    %v1548 = vpop.permute.xlu0 %1547
    %vm1549 = vcmp.eq.s32.totalorder %v1548, 1
    %v1550 = vsel %vm1549, %v1541, %v1388
    %v1551 = vsel %vm1549, %v1539, %v1389
    %s1552 = scalar_lea.vmem [#allocation3], 224
    %v1553 = vld [vmem:[%s1552] sm:$0xff]
    %v1554 = vld [vmem:[%s1552 + $0x8] sm:$0xff]
    %v1555 = vld [vmem:[%s1552 + $0x10] sm:$0xff]
    %v1556 = vld [vmem:[%s1552 + $0x18] sm:$0xff]
    %1557 = vmatpush.msra.mxu0 %v420
    %1558 = vmatpush.msra.mxu0 %v416
    %1559 = vmatpush.msra.mxu0 %v412
    %1560 = vmatpush.msra.mxu0 %v408
    %1561 = vmatpush.msra.mxu0 %v404
    %1562 = vmatpush.msra.mxu0 %v400
    %1563 = vmatpush.msra.mxu0 %v396
    %1564 = vmatpush.msra.mxu0 %v392
    %1565 = vmatpush.msra.mxu0 %v388
    %1566 = vmatpush.msra.mxu0 %v384
    %1567 = vmatpush.msra.mxu0 %v380
    %1568 = vmatpush.msra.mxu0 %v376
    %1569 = vmatpush.msra.mxu0 %v372
    %1570 = vmatpush.msra.mxu0 %v368
    %1571 = vmatpush.msra.mxu0 %v364
    %1572 = vmatpush.msra.mxu0 %v360
    %1573 = vmatmul.f32.gmra.mxu0 %v1550
    %v1574 = vpop.f32.mrf.mxu0
    %v1575 = vadd.f32 0.0, %v1574
    %1576 = vdwg.mxu0
    %1577 = vmatpush.msra.mxu0 %v421
    %1578 = vmatpush.msra.mxu0 %v417
    %1579 = vmatpush.msra.mxu0 %v413
    %1580 = vmatpush.msra.mxu0 %v409
    %1581 = vmatpush.msra.mxu0 %v405
    %1582 = vmatpush.msra.mxu0 %v401
    %1583 = vmatpush.msra.mxu0 %v397
    %1584 = vmatpush.msra.mxu0 %v393
    %1585 = vmatpush.msra.mxu0 %v389
    %1586 = vmatpush.msra.mxu0 %v385
    %1587 = vmatpush.msra.mxu0 %v381
    %1588 = vmatpush.msra.mxu0 %v377
    %1589 = vmatpush.msra.mxu0 %v373
    %1590 = vmatpush.msra.mxu0 %v369
    %1591 = vmatpush.msra.mxu0 %v365
    %1592 = vmatpush.msra.mxu0 %v361
    %1593 = vmatmul.f32.gmra.mxu0 %v1550
    %v1594 = vpop.f32.mrf.mxu0
    %v1595 = vadd.f32 0.0, %v1594
    %1596 = vdwg.mxu0
    %1597 = vmatpush.msra.mxu0 %v422
    %1598 = vmatpush.msra.mxu0 %v418
    %1599 = vmatpush.msra.mxu0 %v414
    %1600 = vmatpush.msra.mxu0 %v410
    %1601 = vmatpush.msra.mxu0 %v406
    %1602 = vmatpush.msra.mxu0 %v402
    %1603 = vmatpush.msra.mxu0 %v398
    %1604 = vmatpush.msra.mxu0 %v394
    %1605 = vmatpush.msra.mxu0 %v390
    %1606 = vmatpush.msra.mxu0 %v386
    %1607 = vmatpush.msra.mxu0 %v382
    %1608 = vmatpush.msra.mxu0 %v378
    %1609 = vmatpush.msra.mxu0 %v374
    %1610 = vmatpush.msra.mxu0 %v370
    %1611 = vmatpush.msra.mxu0 %v366
    %1612 = vmatpush.msra.mxu0 %v362
    %1613 = vmatmul.f32.gmra.mxu0 %v1550
    %v1614 = vpop.f32.mrf.mxu0
    %v1615 = vadd.f32 0.0, %v1614
    %1616 = vdwg.mxu0
    %1617 = vmatpush.msra.mxu0 %v423
    %1618 = vmatpush.msra.mxu0 %v419
    %1619 = vmatpush.msra.mxu0 %v415
    %1620 = vmatpush.msra.mxu0 %v411
    %1621 = vmatpush.msra.mxu0 %v407
    %1622 = vmatpush.msra.mxu0 %v403
    %1623 = vmatpush.msra.mxu0 %v399
    %1624 = vmatpush.msra.mxu0 %v395
    %1625 = vmatpush.msra.mxu0 %v391
    %1626 = vmatpush.msra.mxu0 %v387
    %1627 = vmatpush.msra.mxu0 %v383
    %1628 = vmatpush.msra.mxu0 %v379
    %1629 = vmatpush.msra.mxu0 %v375
    %1630 = vmatpush.msra.mxu0 %v371
    %1631 = vmatpush.msra.mxu0 %v367
    %1632 = vmatpush.msra.mxu0 %v363
    %1633 = vmatmul.f32.gmra.mxu0 %v1550
    %v1634 = vpop.f32.mrf.mxu0
    %v1635 = vadd.f32 0.0, %v1634
    %1636 = vdwg.mxu0
    %v1637 = vadd.f32 %v1553, %v1575
    %v1638 = vadd.f32 %v1554, %v1595
    %v1639 = vadd.f32 %v1555, %v1615
    %v1640 = vadd.f32 %v1556, %v1635
    %v1641 = vxor.u32 %v1637, 2147483648
    %v1642 = vmul.f32 %v1641, 1.442695
    %v1643 = vpow.pop %v1642
    %v1644 = vadd.f32 %v1643, 1.0
    %v1645 = vrcp.pop %v1644
    %v1646 = vmul.f32 %v1644, %v1645
    %v1647 = vsub.f32 1.0, %v1646
    %v1648 = vmul.f32 %v1645, %v1647
    %v1649 = vadd.f32 %v1645, %v1648
    %vm1650 = vweird.f32 %v1644
    %vm1651 = vweird.f32 %v1645
    %vm1652 = vmor %vm1650, %vm1651
    %v1653 = vsel %vm1652, %v1645, %v1649
    %v1654 = vand.u32 2147483647, %v1644
    %vm1655 = vcmp.eq.f32.partialorder %v1654, 8.507059e+37
    %v1656 = vand.u32 %v1644, 2147483648
    %v1657 = vor.u32 1.1754944e-38, %v1656
    %v1658 = vsel %vm1655, %v1657, %v1653
    %v1659 = vmul.f32 1.0, %v1658
    %v1660 = vxor.u32 %v1638, 2147483648
    %v1661 = vmul.f32 %v1660, 1.442695
    %v1662 = vpow.pop %v1661
    %v1663 = vadd.f32 %v1662, 1.0
    %v1664 = vrcp.pop %v1663
    %v1665 = vmul.f32 %v1663, %v1664
    %v1666 = vsub.f32 1.0, %v1665
    %v1667 = vmul.f32 %v1664, %v1666
    %v1668 = vadd.f32 %v1664, %v1667
    %vm1669 = vweird.f32 %v1663
    %vm1670 = vweird.f32 %v1664
    %vm1671 = vmor %vm1669, %vm1670
    %v1672 = vsel %vm1671, %v1664, %v1668
    %v1673 = vand.u32 2147483647, %v1663
    %vm1674 = vcmp.eq.f32.partialorder %v1673, 8.507059e+37
    %v1675 = vand.u32 %v1663, 2147483648
    %v1676 = vor.u32 1.1754944e-38, %v1675
    %v1677 = vsel %vm1674, %v1676, %v1672
    %v1678 = vmul.f32 1.0, %v1677
    %v1679 = vtanh.pop %v1639
    %v1680 = vxor.u32 %v1640, 2147483648
    %v1681 = vmul.f32 %v1680, 1.442695
    %v1682 = vpow.pop %v1681
    %v1683 = vadd.f32 %v1682, 1.0
    %v1684 = vrcp.pop %v1683
    %v1685 = vmul.f32 %v1683, %v1684
    %v1686 = vsub.f32 1.0, %v1685
    %v1687 = vmul.f32 %v1684, %v1686
    %v1688 = vadd.f32 %v1684, %v1687
    %vm1689 = vweird.f32 %v1683
    %vm1690 = vweird.f32 %v1684
    %vm1691 = vmor %vm1689, %vm1690
    %v1692 = vsel %vm1691, %v1684, %v1688
    %v1693 = vand.u32 2147483647, %v1683
    %vm1694 = vcmp.eq.f32.partialorder %v1693, 8.507059e+37
    %v1695 = vand.u32 %v1683, 2147483648
    %v1696 = vor.u32 1.1754944e-38, %v1695
    %v1697 = vsel %vm1694, %v1696, %v1692
    %v1698 = vmul.f32 1.0, %v1697
    %v1699 = vmul.f32 %v1678, %v1551
    %v1700 = vmul.f32 %v1659, %v1679
    %v1701 = vadd.f32 %v1699, %v1700
    %v1702 = vtanh.pop %v1701
    %v1703 = vmul.f32 %v1698, %v1702
    %s1704 = sadd.s32 %s353, 7
    %v1705 = vstv %s1704
    %vm1706 = vcmp.gt.s32.totalorder %v352, %v1705
    %v1707 = vsel %vm1706, 1, 0
    %1708 = vset.pattern.permute.xlu0 0
    %1709 = vperm.xlu0 %1708, %v1707
    %v1710 = vpop.permute.xlu0 %1709
    %vm1711 = vcmp.eq.s32.totalorder %v1710, 1
    %v1712 = vsel %vm1711, %v1703, %v1550
    %v1713 = vsel %vm1711, %v1701, %v1551
    %1714 = vst [vmem:[#allocation10] sm:$0xff] %v1712
    %1715 = vst [vmem:[#allocation2] sm:$0xff] %v1713
    // Predicated region
    $region38: #{tpu_custom_call.1} parent=1 // pred_check
      _
    $region39: #{tpu_custom_call.1} parent=1 // pred_check_branch
      %1717 = sbr.rel (0) target = $region41
    $region40: #{tpu_custom_call.1} parent=1 // pred_region
      %1719 = vsyncadd [#allocation6], 0
      %s1721 = sshll.u32 [#allocation10], 4
      %s1722 = int_to_ptr.vmem [resolvable:$true] %s1721
      %s1723 = sshll.u32 %s5, 4
      %s1724 = int_to_ptr.hbm [resolvable:$true] %s1723
      %1726 = dma.vmem_to_hbm [thread:$0]  %s1722, 128, %s1724, [#allocation6]
    $region41: #{tpu_custom_call.1} parent=1 // pred_fallthru
      _
    // Predicated region
    $region42: #{tpu_custom_call.1} parent=1 // pred_check
      _
    $region43: #{tpu_custom_call.1} parent=1 // pred_check_branch
      %1728 = sbr.rel (0) target = $region45
    $region44: #{tpu_custom_call.1} parent=1 // pred_region
      %1730 = dma.done [#allocation6], 128
    $region45: #{tpu_custom_call.1} parent=1 // pred_fallthru
      _
    %1731 = vsyncpa [#allocation5], 1
    %1732 = vsyncpa [#allocation8], 1
    %1733 = vsyncpa [#allocation6], 1

</llo_original>
